<compile_context>
chip_gen: v7x
topology: tpu7x:2x2x1
jax: 0.10.0
libtpu: 0.0.40
codegen_flags: <defaults>
</compile_context>

<pallas_src>
import math
import functools

import jax
import jax.numpy as jnp
from jax.experimental import pallas as pl
from jax.experimental.pallas import tpu as pltpu

_SILU_SCALE = 1.0 / 0.6
_HALF_SCALE = 0.5 * _SILU_SCALE
_INV_SQRT2 = 1.0 / math.sqrt(2.0)


def _scaled_silu_f32(v):
    # ScaledSiLU(v) = v * sigmoid(v) / 0.6, with sigmoid(v) = 0.5 * (1 + tanh(0.5 v)).
    # One EUP op (tanh) + VPU mul/add; bounded, so no exp(-v) -> inf path.
    return (v * _HALF_SCALE) * (1.0 + jnp.tanh(0.5 * v))


def _final_mlp_kernel(x_ref, w0_ref, wres_ref, o_ref, *, num_res_layers):
    # x_ref   : (tm, in_features)   VMEM, input dtype (f32 or bf16)
    # w0_ref  : (in_features, emb)  VMEM, bf16, full-resident
    # wres_ref: (2*L, emb, emb)     VMEM, bf16, full-resident
    # o_ref   : (tm, emb)           VMEM
    #
    # MXU operands are bf16; accumulation stays f32 via preferred_element_type;
    # elementwise math is f32 (safe on v5e, which lacks bf16 VPU/EUP).
    x = x_ref[...].astype(jnp.bfloat16)  # no-op if the producer already emits bf16

    # Dense(in_features -> emb), bias=False, ScaledSiLU
    h = _scaled_silu_f32(
        jnp.dot(x, w0_ref[...], preferred_element_type=jnp.float32)
    )

    # Residual layers.  L is small (2): static unroll with static (zero-cost) slices.
    # Switch to lax.fori_loop with a dynamic first-axis index if L grows past ~4.
    for i in range(num_res_layers):
        w1 = wres_ref[2 * i]
        w2 = wres_ref[2 * i + 1]
        y = _scaled_silu_f32(
            jnp.dot(h.astype(jnp.bfloat16), w1, preferred_element_type=jnp.float32)
        )
        y = _scaled_silu_f32(
            jnp.dot(y.astype(jnp.bfloat16), w2, preferred_element_type=jnp.float32)
        )
        h = (h + y) * _INV_SQRT2

    o_ref[...] = h.astype(o_ref.dtype)


def _round_up(n, m):
    return ((n + m - 1) // m) * m


def _vmem_bytes(tm, in_features, emb, L, io_itemsize):
    # Rough per-kernel VMEM footprint: double-buffered x / out tiles, double-buffered
    # bf16 weights, plus the live in-kernel intermediates (bf16 x copy, f32 h / y,
    # bf16 recasts of h / y).
    x_bufs = 2 * tm * in_features * io_itemsize
    out_bufs = 2 * tm * emb * io_itemsize
    w_bufs = 2 * 2 * (in_features * emb + 2 * L * emb * emb)
    interm = tm * in_features * 2 + tm * emb * (4 + 4 + 2 + 2)
    return x_bufs + out_bufs + w_bufs + interm


def final_mlp(x, w0, w_res, *, tm_max=1024):
    """x: (N, in_features); w0: (in_features, emb); w_res: (L, 2, emb, emb)."""
    N, in_features = x.shape
    emb = w0.shape[1]
    L = w_res.shape[0]
    io_itemsize = x.dtype.itemsize

    # One-time bf16 cast of the (small) weights; flatten to (2L, emb, emb) for
    # static, zero-cost slicing inside the kernel.
    w0_bf = w0.astype(jnp.bfloat16)
    wres_bf = w_res.reshape(2 * L, emb, emb).astype(jnp.bfloat16)

    # Row tile: aim for ~8 grid steps (clamped to [256, tm_max], multiple of 128) so
    # double-buffering has something to overlap and v7x's two TensorCores both get
    # work from the "parallel" grid axis.  No padding: ragged last block is handled
    # by Pallas masking the out-of-range output rows.
    tm_eff = _round_up(pl.cdiv(N, 8), 128)
    tm_eff = max(256, min(tm_eff, tm_max))

    # VMEM-aware clamp (keep the pipelined tiles well under every generation's
    # scoped-VMEM budget: v5e default 16 MiB, v7x physical 64 MiB).
    tile_budget = 24 << 20
    while tm_eff > 256 and _vmem_bytes(tm_eff, in_features, emb, L, io_itemsize) > tile_budget:
        tm_eff -= 128
    est_vmem = _vmem_bytes(tm_eff, in_features, emb, L, io_itemsize)
    vmem_limit = int(min(max(est_vmem + (4 << 20), 16 << 20), 48 << 20))

    grid = (pl.cdiv(N, tm_eff),)

    # Advisory cost estimate: real byte counts (no pad bytes), one tanh per activated
    # element.
    flops = 2 * N * (in_features * emb + 2 * L * emb * emb)
    transcendentals = N * emb * (1 + 2 * L)
    bytes_accessed = (
        N * in_features * io_itemsize   # x in
        + N * emb * io_itemsize         # out
        + w0_bf.size * 2                # bf16 weights
        + wres_bf.size * 2
    )

    kernel = functools.partial(_final_mlp_kernel, num_res_layers=L)

    out = pl.pallas_call(
        kernel,
        out_shape=jax.ShapeDtypeStruct((N, emb), x.dtype),
        grid_spec=pltpu.PrefetchScalarGridSpec(
            num_scalar_prefetch=0,
            grid=grid,
            in_specs=[
                pl.BlockSpec((tm_eff, in_features), lambda i: (i, 0)),
                pl.BlockSpec((in_features, emb), lambda i: (0, 0)),
                pl.BlockSpec((2 * L, emb, emb), lambda i: (0, 0, 0)),
            ],
            out_specs=pl.BlockSpec((tm_eff, emb), lambda i: (i, 0)),
        ),
        compiler_params=pltpu.CompilerParams(
            dimension_semantics=("parallel",),
            vmem_limit_bytes=vmem_limit,
        ),
        cost_estimate=pl.CostEstimate(
            flops=flops,
            transcendentals=transcendentals,
            bytes_accessed=bytes_accessed,
        ),
    )(x, w0_bf, wres_bf)

    return out


def final_mlp_reference(x, w0, w_res):
    def scaled_silu(v):
        return v * jax.nn.sigmoid(v) * _SILU_SCALE

    h = scaled_silu(x @ w0)
    for i in range(w_res.shape[0]):
        y = scaled_silu(h @ w_res[i, 0])
        y = scaled_silu(y @ w_res[i, 1])
        h = (h + y) * _INV_SQRT2
    return h


if __name__ == "__main__":
    # Module hyperparameters (consistent with FinalMLP.__init__)
    emb_size = 128
    num_blocks = 3
    num_global_out_layers = 2
    in_features = emb_size * (num_blocks + 1)  # 512
    # N not a multiple of the row tile -> exercises the ragged (masked) last block.
    N = 300

    key = jax.random.PRNGKey(0)
    kx, kw0, kwr = jax.random.split(key, 3)

    x = jax.random.normal(kx, (N, in_features), dtype=jnp.float32)

    # Deterministic synthetic weights, stored (in, out), roughly Kaiming-scaled.
    w0 = jax.random.normal(kw0, (in_features, emb_size), dtype=jnp.float32) * (
        1.0 / math.sqrt(in_features)
    )
    w_res = jax.random.normal(
        kwr, (num_global_out_layers, 2, emb_size, emb_size), dtype=jnp.float32
    ) * (1.0 / math.sqrt(emb_size))

    out = final_mlp(x, w0, w_res)
    out = jax.block_until_ready(out)

    ref = final_mlp_reference(x, w0, w_res)
    assert out.shape == (N, emb_size)

    # bf16 MXU operands + tanh-form sigmoid -> small numeric drift vs the f32
    # reference (ScaledSiLU is not bit-matching the PyTorch sigmoid path).
    rel_err = float(jnp.max(jnp.abs(out - ref)) / (jnp.max(jnp.abs(ref)) + 1e-8))
    assert rel_err < 2e-2, f"mismatch vs reference: rel_err={rel_err}"

    print("KERNEL_OK")
</pallas_src>

<mosaic_0001>
module attributes {stable_mosaic.version = 11 : i64} {
  func.func @_final_mlp_kernel(%arg0: i32, %arg1: memref<256x512xf32, #tpu.memory_space<vmem>>, %arg2: memref<512x128xbf16, #tpu.memory_space<vmem>>, %arg3: memref<4x128x128xbf16, #tpu.memory_space<vmem>>, %arg4: memref<256x128xf32, #tpu.memory_space<vmem>>) attributes {dimension_semantics = [#tpu.dimension_semantics<parallel>], iteration_bounds = array<i64: 2>, scalar_prefetch = 0 : i64, scratch_operands = 0 : i64, tpu.core_type = #tpu.core_type<tc>, window_params = [{transform_indices = @transform_0, window_bounds = array<i64: 256, 512>}, {pipeline_mode = #tpu.pipeline_mode<synchronous>, transform_indices = @transform_1, window_bounds = array<i64: 512, 128>}, {pipeline_mode = #tpu.pipeline_mode<synchronous>, transform_indices = @transform_2, window_bounds = array<i64: 4, 128, 128>}, {transform_indices = @transform_3, window_bounds = array<i64: 256, 128>}]} {
    %c0 = arith.constant 0 : index
    %c0_0 = arith.constant 0 : index
    %0 = vector.load %arg1[%c0, %c0_0] : memref<256x512xf32, #tpu.memory_space<vmem>>, vector<256x512xf32>
    %1 = arith.truncf %0 : vector<256x512xf32> to vector<256x512xbf16>
    %c0_1 = arith.constant 0 : index
    %c0_2 = arith.constant 0 : index
    %2 = vector.load %arg2[%c0_1, %c0_2] : memref<512x128xbf16, #tpu.memory_space<vmem>>, vector<512x128xbf16>
    %cst = arith.constant dense<0.000000e+00> : vector<256x128xf32>
    %3 = tpu.matmul %1, %2, %cst {dimension_numbers = #tpu.dot_dimension_numbers<[1], [0], [0], [1], [0, 0, 1, 1], [], []>} : vector<256x512xbf16>, vector<512x128xbf16>, vector<256x128xf32> -> vector<256x128xf32>
    %cst_3 = arith.constant 0.833333313 : f32
    %4 = vector.broadcast %cst_3 : f32 to vector<256x128xf32>
    %5 = arith.mulf %3, %4 : vector<256x128xf32>
    %cst_4 = arith.constant 5.000000e-01 : f32
    %6 = vector.broadcast %cst_4 : f32 to vector<256x128xf32>
    %7 = arith.mulf %6, %3 : vector<256x128xf32>
    %8 = math.tanh %7 : vector<256x128xf32>
    %cst_5 = arith.constant 1.000000e+00 : f32
    %9 = vector.broadcast %cst_5 : f32 to vector<256x128xf32>
    %10 = arith.addf %9, %8 : vector<256x128xf32>
    %11 = arith.mulf %5, %10 : vector<256x128xf32>
    %c0_6 = arith.constant 0 : index
    %c0_7 = arith.constant 0 : index
    %c0_8 = arith.constant 0 : index
    %12 = vector.load %arg3[%c0_6, %c0_7, %c0_8] : memref<4x128x128xbf16, #tpu.memory_space<vmem>>, vector<1x128x128xbf16>
    %13 = vector.shape_cast %12 : vector<1x128x128xbf16> to vector<128x128xbf16>
    %c1 = arith.constant 1 : index
    %c0_9 = arith.constant 0 : index
    %c0_10 = arith.constant 0 : index
    %14 = vector.load %arg3[%c1, %c0_9, %c0_10] : memref<4x128x128xbf16, #tpu.memory_space<vmem>>, vector<1x128x128xbf16>
    %15 = vector.shape_cast %14 : vector<1x128x128xbf16> to vector<128x128xbf16>
    %16 = arith.truncf %11 : vector<256x128xf32> to vector<256x128xbf16>
    %cst_11 = arith.constant dense<0.000000e+00> : vector<256x128xf32>
    %17 = tpu.matmul %16, %13, %cst_11 {dimension_numbers = #tpu.dot_dimension_numbers<[1], [0], [0], [1], [0, 0, 1, 1], [], []>} : vector<256x128xbf16>, vector<128x128xbf16>, vector<256x128xf32> -> vector<256x128xf32>
    %cst_12 = arith.constant 0.833333313 : f32
    %18 = vector.broadcast %cst_12 : f32 to vector<256x128xf32>
    %19 = arith.mulf %17, %18 : vector<256x128xf32>
    %cst_13 = arith.constant 5.000000e-01 : f32
    %20 = vector.broadcast %cst_13 : f32 to vector<256x128xf32>
    %21 = arith.mulf %20, %17 : vector<256x128xf32>
    %22 = math.tanh %21 : vector<256x128xf32>
    %cst_14 = arith.constant 1.000000e+00 : f32
    %23 = vector.broadcast %cst_14 : f32 to vector<256x128xf32>
    %24 = arith.addf %23, %22 : vector<256x128xf32>
    %25 = arith.mulf %19, %24 : vector<256x128xf32>
    %26 = arith.truncf %25 : vector<256x128xf32> to vector<256x128xbf16>
    %cst_15 = arith.constant dense<0.000000e+00> : vector<256x128xf32>
    %27 = tpu.matmul %26, %15, %cst_15 {dimension_numbers = #tpu.dot_dimension_numbers<[1], [0], [0], [1], [0, 0, 1, 1], [], []>} : vector<256x128xbf16>, vector<128x128xbf16>, vector<256x128xf32> -> vector<256x128xf32>
    %cst_16 = arith.constant 0.833333313 : f32
    %28 = vector.broadcast %cst_16 : f32 to vector<256x128xf32>
    %29 = arith.mulf %27, %28 : vector<256x128xf32>
    %cst_17 = arith.constant 5.000000e-01 : f32
    %30 = vector.broadcast %cst_17 : f32 to vector<256x128xf32>
    %31 = arith.mulf %30, %27 : vector<256x128xf32>
    %32 = math.tanh %31 : vector<256x128xf32>
    %cst_18 = arith.constant 1.000000e+00 : f32
    %33 = vector.broadcast %cst_18 : f32 to vector<256x128xf32>
    %34 = arith.addf %33, %32 : vector<256x128xf32>
    %35 = arith.mulf %29, %34 : vector<256x128xf32>
    %36 = arith.addf %11, %35 : vector<256x128xf32>
    %cst_19 = arith.constant 0.707106769 : f32
    %37 = vector.broadcast %cst_19 : f32 to vector<256x128xf32>
    %38 = arith.mulf %36, %37 : vector<256x128xf32>
    %c2 = arith.constant 2 : index
    %c0_20 = arith.constant 0 : index
    %c0_21 = arith.constant 0 : index
    %39 = vector.load %arg3[%c2, %c0_20, %c0_21] : memref<4x128x128xbf16, #tpu.memory_space<vmem>>, vector<1x128x128xbf16>
    %40 = vector.shape_cast %39 : vector<1x128x128xbf16> to vector<128x128xbf16>
    %c3 = arith.constant 3 : index
    %c0_22 = arith.constant 0 : index
    %c0_23 = arith.constant 0 : index
    %41 = vector.load %arg3[%c3, %c0_22, %c0_23] : memref<4x128x128xbf16, #tpu.memory_space<vmem>>, vector<1x128x128xbf16>
    %42 = vector.shape_cast %41 : vector<1x128x128xbf16> to vector<128x128xbf16>
    %43 = arith.truncf %38 : vector<256x128xf32> to vector<256x128xbf16>
    %cst_24 = arith.constant dense<0.000000e+00> : vector<256x128xf32>
    %44 = tpu.matmul %43, %40, %cst_24 {dimension_numbers = #tpu.dot_dimension_numbers<[1], [0], [0], [1], [0, 0, 1, 1], [], []>} : vector<256x128xbf16>, vector<128x128xbf16>, vector<256x128xf32> -> vector<256x128xf32>
    %cst_25 = arith.constant 0.833333313 : f32
    %45 = vector.broadcast %cst_25 : f32 to vector<256x128xf32>
    %46 = arith.mulf %44, %45 : vector<256x128xf32>
    %cst_26 = arith.constant 5.000000e-01 : f32
    %47 = vector.broadcast %cst_26 : f32 to vector<256x128xf32>
    %48 = arith.mulf %47, %44 : vector<256x128xf32>
    %49 = math.tanh %48 : vector<256x128xf32>
    %cst_27 = arith.constant 1.000000e+00 : f32
    %50 = vector.broadcast %cst_27 : f32 to vector<256x128xf32>
    %51 = arith.addf %50, %49 : vector<256x128xf32>
    %52 = arith.mulf %46, %51 : vector<256x128xf32>
    %53 = arith.truncf %52 : vector<256x128xf32> to vector<256x128xbf16>
    %cst_28 = arith.constant dense<0.000000e+00> : vector<256x128xf32>
    %54 = tpu.matmul %53, %42, %cst_28 {dimension_numbers = #tpu.dot_dimension_numbers<[1], [0], [0], [1], [0, 0, 1, 1], [], []>} : vector<256x128xbf16>, vector<128x128xbf16>, vector<256x128xf32> -> vector<256x128xf32>
    %cst_29 = arith.constant 0.833333313 : f32
    %55 = vector.broadcast %cst_29 : f32 to vector<256x128xf32>
    %56 = arith.mulf %54, %55 : vector<256x128xf32>
    %cst_30 = arith.constant 5.000000e-01 : f32
    %57 = vector.broadcast %cst_30 : f32 to vector<256x128xf32>
    %58 = arith.mulf %57, %54 : vector<256x128xf32>
    %59 = math.tanh %58 : vector<256x128xf32>
    %cst_31 = arith.constant 1.000000e+00 : f32
    %60 = vector.broadcast %cst_31 : f32 to vector<256x128xf32>
    %61 = arith.addf %60, %59 : vector<256x128xf32>
    %62 = arith.mulf %56, %61 : vector<256x128xf32>
    %63 = arith.addf %38, %62 : vector<256x128xf32>
    %cst_32 = arith.constant 0.707106769 : f32
    %64 = vector.broadcast %cst_32 : f32 to vector<256x128xf32>
    %65 = arith.mulf %63, %64 : vector<256x128xf32>
    %c0_33 = arith.constant 0 : index
    %c0_34 = arith.constant 0 : index
    %66 = vector.load %arg4[%c0_33, %c0_34] : memref<256x128xf32, #tpu.memory_space<vmem>>, vector<256x128xf32>
    tpu.vector_store %arg4[%c0_33, %c0_34], %65 {strides = array<i32>} : memref<256x128xf32, #tpu.memory_space<vmem>>, vector<256x128xf32>,
    return
  }
  func.func @transform_0(%arg0: i32) -> (i32, i32) {
    %c0_i32 = arith.constant 0 : i32
    %c0_i32_0 = arith.constant 0 : i32
    return %arg0, %c0_i32 : i32, i32
  }
  func.func @transform_1(%arg0: i32) -> (i32, i32) {
    %c0_i32 = arith.constant 0 : i32
    %c0_i32_0 = arith.constant 0 : i32
    %c0_i32_1 = arith.constant 0 : i32
    return %c0_i32, %c0_i32_0 : i32, i32
  }
  func.func @transform_2(%arg0: i32) -> (i32, i32, i32) {
    %c0_i32 = arith.constant 0 : i32
    %c0_i32_0 = arith.constant 0 : i32
    %c0_i32_1 = arith.constant 0 : i32
    %c0_i32_2 = arith.constant 0 : i32
    return %c0_i32, %c0_i32_0, %c0_i32_1 : i32, i32, i32
  }
  func.func @transform_3(%arg0: i32) -> (i32, i32) {
    %c0_i32 = arith.constant 0 : i32
    %c0_i32_0 = arith.constant 0 : i32
    return %arg0, %c0_i32 : i32, i32
  }
}

</mosaic_0001>

<llo_original>
// kernel: tpu_custom_call.1
$region0: #{tpu_custom_call.1}
  #allocation0 [shape = 'u32[]', space=smem, size = 0x4, offset = 0x4, fixed_abs, tag = 'smem constant byte address 0x4 - core index']
  #allocation1 [shape = 'u32[144,128]{1,0:T(1,128)}', space=vmem, size = 0x12000, scoped, tag = 'internal scratch']
  %s0 = inlined_call_operand.hbm [shape: f32[300,512], index: 0, kind: input, shape index: {}]
  %s1 = inlined_call_operand.hbm [shape: bf16[512,128], index: 1, kind: input, shape index: {}]
  %s2 = inlined_call_operand.hbm [shape: bf16[4,128,128], index: 2, kind: input, shape index: {}]
  %s3 = inlined_call_operand.hbm [shape: f32[300,128], index: 3, kind: output, shape index: {}]
  %s4 = sld [smem:[#allocation0]]
  $region57: #{tpu_custom_call.1} parent=0
    _
  %s6 = ssub.s32 1, %s4
  %s7 = scalar_select 0, %s6, %s4
  $region1: #{tpu_custom_call.1} parent=0
    #allocation2 [shape = 'u8[1048576]{0}', space=vmem, size = 0x100000, scoped, tag = 'input window, operand 0']
    #allocation3 [shape = 's32[2]{0}', space=sflag, size = 0x8, scoped, tag = 'scoped memory for tpu_custom_call.1']
    #allocation4 [shape = 's32[2]{0}', space=sflag, size = 0x8, scoped, tag = 'scoped memory for tpu_custom_call.1']
    #allocation5 [shape = 'u8[131072]{0}', space=vmem, size = 0x20000, scoped, tag = 'input window, operand 1, single buffered']
    #allocation6 [shape = 's32[1]{0}', space=sflag, size = 0x4, scoped, tag = 'scoped memory for tpu_custom_call.1']
    #allocation7 [shape = 'u8[131072]{0}', space=vmem, size = 0x20000, scoped, tag = 'input window, operand 2, single buffered']
    #allocation8 [shape = 'u8[262144]{0}', space=vmem, size = 0x40000, scoped, tag = 'output window, operand 0']
    %8 = vsyncpa [#allocation3], 0
    %s9 = scalar_lea.sflag [#allocation3], 1
    %10 = vsyncpa %s9, 0
    %11 = vsyncpa [#allocation6], 0
    %12 = vsyncpa [#allocation4], 0
    %s13 = scalar_lea.sflag [#allocation4], 1
    %14 = vsyncpa %s13, 0
    loop: start=0, step=1, limit=4
    $region2: #{tpu_custom_call.1} parent=1 // loop_pre_header
      _
    $region3: #{tpu_custom_call.1} parent=1 // loop_header
      %s16 = sphi 0, %s20
      %p17 = scmp.ge.s32.totalorder %s16, 4
      %s26 = sphi 0, %s28
      %s29 = sphi 0, %s26
      %s30 = sphi 0, %s29
      %s46 = sphi 0, %s30
      %s50 = sphi 0, %s50
      %s52 = sphi 0, %s50
      %s53 = sphi 0, %s52
      %s67 = sphi 0, %s53
      %s71 = sphi 0, %s71
      %s73 = sphi 0, %s71
      %s74 = sphi 0, %s73
      %s88 = sphi 0, %s74
      %s94 = sphi 0, %s96
      %s97 = sphi 0, %s94
      %s98 = sphi 0, %s97
      %s114 = sphi 0, %s98
    $region4: #{tpu_custom_call.1} parent=1 // loop_header_branch
      %19 = sbr.rel (%p17) target = $region8
    $region5: #{tpu_custom_call.1} parent=1 // loop_body
      %s21 = ssub.s32 %s16, 1
      %s22 = ssub.s32 %s16, 2
      %s23 = sadd.s32 %s16, 1
      %s24 = ssub.s32 %s16, %s23
      %p25 = scmp.eq.s32.totalorder %s24, 0
      %s27 = sadd.s32 %s26, 1
      %s28 = scalar_select %p25, %s26, %s27
      %p31 = pneg %p25
      %p32 = scmp.eq.s32.totalorder %s16, 1
      %p33 = por %p31, %p32
      %p34 = scmp.ne.s32.totalorder %s26, %s29
      %p35 = scmp.eq.s32.totalorder %s16, 0
      %p36 = por %p34, %p35
      %p37 = scmp.ne.s32.totalorder %s26, %s29
      %p38 = scmp.eq.s32.totalorder %s21, 1
      %p39 = por %p37, %p38
      %p40 = scmp.ne.s32.totalorder %s29, %s30
      %p41 = scmp.eq.s32.totalorder %s21, 0
      %p42 = por %p40, %p41
      %p43 = scmp.ne.s32.totalorder %s29, %s30
      %p44 = scmp.eq.s32.totalorder %s22, 1
      %p45 = por %p43, %p44
      %p47 = scmp.ne.s32.totalorder %s30, %s46
      %p48 = scmp.eq.s32.totalorder %s22, 0
      %p49 = por %p47, %p48
      %s51 = sadd.s32 %s50, 1
      %p54 = scmp.eq.s32.totalorder %s16, 1
      %p55 = scmp.ne.s32.totalorder %s50, %s52
      %p56 = scmp.eq.s32.totalorder %s16, 0
      %p57 = por %p55, %p56
      %p58 = scmp.ne.s32.totalorder %s50, %s52
      %p59 = scmp.eq.s32.totalorder %s21, 1
      %p60 = por %p58, %p59
      %p61 = scmp.ne.s32.totalorder %s52, %s53
      %p62 = scmp.eq.s32.totalorder %s21, 0
      %p63 = por %p61, %p62
      %p64 = scmp.ne.s32.totalorder %s52, %s53
      %p65 = scmp.eq.s32.totalorder %s22, 1
      %p66 = por %p64, %p65
      %p68 = scmp.ne.s32.totalorder %s53, %s67
      %p69 = scmp.eq.s32.totalorder %s22, 0
      %p70 = por %p68, %p69
      %s72 = sadd.s32 %s71, 1
      %p75 = scmp.eq.s32.totalorder %s16, 1
      %p76 = scmp.ne.s32.totalorder %s71, %s73
      %p77 = scmp.eq.s32.totalorder %s16, 0
      %p78 = por %p76, %p77
      %p79 = scmp.ne.s32.totalorder %s71, %s73
      %p80 = scmp.eq.s32.totalorder %s21, 1
      %p81 = por %p79, %p80
      %p82 = scmp.ne.s32.totalorder %s73, %s74
      %p83 = scmp.eq.s32.totalorder %s21, 0
      %p84 = por %p82, %p83
      %p85 = scmp.ne.s32.totalorder %s73, %s74
      %p86 = scmp.eq.s32.totalorder %s22, 1
      %p87 = por %p85, %p86
      %p89 = scmp.ne.s32.totalorder %s74, %s88
      %p90 = scmp.eq.s32.totalorder %s22, 0
      %p91 = por %p89, %p90
      %s92 = ssub.s32 %s16, %s23
      %p93 = scmp.eq.s32.totalorder %s92, 0
      %s95 = sadd.s32 %s94, 1
      %s96 = scalar_select %p93, %s94, %s95
      %p99 = pneg %p93
      %p100 = scmp.eq.s32.totalorder %s16, 1
      %p101 = por %p99, %p100
      %p102 = scmp.ne.s32.totalorder %s94, %s97
      %p103 = scmp.eq.s32.totalorder %s16, 0
      %p104 = por %p102, %p103
      %p105 = scmp.ne.s32.totalorder %s94, %s97
      %p106 = scmp.eq.s32.totalorder %s21, 1
      %p107 = por %p105, %p106
      %p108 = scmp.ne.s32.totalorder %s97, %s98
      %p109 = scmp.eq.s32.totalorder %s21, 0
      %p110 = por %p108, %p109
      %p111 = scmp.ne.s32.totalorder %s97, %s98
      %p112 = scmp.eq.s32.totalorder %s22, 1
      %p113 = por %p111, %p112
      %p115 = scmp.ne.s32.totalorder %s98, %s114
      %p116 = scmp.eq.s32.totalorder %s22, 0
      %p117 = por %p115, %p116
      %p118 = scmp.le.s32.totalorder 1, %s16
      %p119 = scmp.lt.s32.totalorder %s16, 3
      %p120 = pnand %p118, %p119
      %p121 = pneg %p120
      // Predicated region
      $region9: #{tpu_custom_call.1} parent=5 // pred_check
        _
      $region10: #{tpu_custom_call.1} parent=5 // pred_check_branch
        %123 = sbr.rel (%p120) target = $region12
      $region11: #{tpu_custom_call.1} parent=5 // pred_region
        %s124 = ssub.s32 %s16, 1
        // Predicated region
        $region13: #{tpu_custom_call.1} parent=11 // pred_check
          %p125 = pneg %p63
        $region14: #{tpu_custom_call.1} parent=11 // pred_check_branch
          %127 = sbr.rel (%p125) target = $region16
        $region15: #{tpu_custom_call.1} parent=11 // pred_region
          %s129 = ssub.s32 4096, 4096
          %130 = vsyncadd [#allocation6], %s129
          %s131 = sshll.u32 [#allocation5], 4
          %s132 = int_to_ptr.vmem [resolvable:$true] %s131
          %137 = dma.hbm_to_vmem [thread:$0]  %s1, 4096, %s132, [#allocation6], 64, 64, 4
        $region16: #{tpu_custom_call.1} parent=11 // pred_fallthru
          _
        // Predicated region
        $region17: #{tpu_custom_call.1} parent=11 // pred_check
          %p138 = pneg %p84
        $region18: #{tpu_custom_call.1} parent=11 // pred_check_branch
          %140 = sbr.rel (%p138) target = $region20
        $region19: #{tpu_custom_call.1} parent=11 // pred_region
          %s142 = ssub.s32 4096, 4096
          %143 = vsyncadd [#allocation6], %s142
          %s144 = sshll.u32 [#allocation7], 4
          %s145 = int_to_ptr.vmem [resolvable:$true] %s144
          %150 = dma.hbm_to_vmem [thread:$0]  %s2, 4096, %s145, [#allocation6], 64, 64, 4
        $region20: #{tpu_custom_call.1} parent=11 // pred_fallthru
          _
      $region12: #{tpu_custom_call.1} parent=5 // pred_fallthru
        _
      %p151 = scmp.lt.s32.totalorder %s16, 2
      // Predicated region
      $region21: #{tpu_custom_call.1} parent=5 // pred_check
        %p152 = pneg %p151
      $region22: #{tpu_custom_call.1} parent=5 // pred_check_branch
        %154 = sbr.rel (%p152) target = $region24
      $region23: #{tpu_custom_call.1} parent=5 // pred_region
        // Predicated region
        $region25: #{tpu_custom_call.1} parent=23 // pred_check
          %p155 = pneg %p36
        $region26: #{tpu_custom_call.1} parent=23 // pred_check_branch
          %157 = sbr.rel (%p155) target = $region28
        $region27: #{tpu_custom_call.1} parent=23 // pred_region
          %s158 = sand.u32 %s26, 1
          %s159 = scalar_lea.sflag [#allocation3], %s158
          %s160 = sand.u32 %s26, 1
          %s161 = smul.addr %s160, 1024
          %s162 = scalar_lea.vmem [#allocation2], %s161
          %s163 = smul.u32 32, %s16
          %s164 = ssub.s32 38, %s163
          %p165 = scmp.lt.s32.totalorder %s164, 32
          %s166 = scalar_select %p165, %s164, 32
          %s167 = smul.u32 128, %s166
          %s168 = smul.u32 %s167, 4
          %s170 = ssub.s32 16384, %s168
          %171 = vsyncadd %s159, %s170
          %p172 = scmp.ne.s32.totalorder 0, %s168
          %s173 = smul.addr %s163, 4
          %s174 = smul.addr %s173, 128
          %s175 = scalar_lea.hbm %s0, %s174
          %s176 = smul.u32 32, %s166
          %s177 = sshll.u32 %s162, 4
          %s178 = int_to_ptr.vmem [resolvable:$true] %s177
          %s179 = sshll.u32 %s176, 4
          %183 = dma.hbm_to_vmem [thread:$0]  (%p172), %s175, %s179, %s178, %s159, 512, 512, 32
        $region28: #{tpu_custom_call.1} parent=23 // pred_fallthru
          _
      $region24: #{tpu_custom_call.1} parent=5 // pred_fallthru
        _
      %p184 = scmp.le.s32.totalorder 1, %s16
      %p185 = scmp.lt.s32.totalorder %s16, 3
      %p186 = pnand %p184, %p185
      %p187 = pneg %p186
      // Predicated region
      $region29: #{tpu_custom_call.1} parent=5 // pred_check
        _
      $region30: #{tpu_custom_call.1} parent=5 // pred_check_branch
        %189 = sbr.rel (%p186) target = $region32
      $region31: #{tpu_custom_call.1} parent=5 // pred_region
        %s190 = ssub.s32 %s16, 1
        %s191 = sand.u32 %s29, 1
        %s192 = scalar_lea.sflag [#allocation3], %s191
        %s193 = sand.u32 %s29, 1
        %s194 = smul.addr %s193, 1024
        %s195 = scalar_lea.vmem [#allocation2], %s194
        // Predicated region
        $region33: #{tpu_custom_call.1} parent=31 // pred_check
          %p196 = pneg %p42
        $region34: #{tpu_custom_call.1} parent=31 // pred_check_branch
          %198 = sbr.rel (%p196) target = $region36
        $region35: #{tpu_custom_call.1} parent=31 // pred_region
          %199 = dma.done %s192, 16384
        $region36: #{tpu_custom_call.1} parent=31 // pred_fallthru
          _
        // Predicated region
        $region37: #{tpu_custom_call.1} parent=31 // pred_check
          %p200 = pneg %p63
        $region38: #{tpu_custom_call.1} parent=31 // pred_check_branch
          %202 = sbr.rel (%p200) target = $region40
        $region39: #{tpu_custom_call.1} parent=31 // pred_region
          %203 = dma.done [#allocation6], 4096
        $region40: #{tpu_custom_call.1} parent=31 // pred_fallthru
          _
        // Predicated region
        $region41: #{tpu_custom_call.1} parent=31 // pred_check
          %p204 = pneg %p84
        $region42: #{tpu_custom_call.1} parent=31 // pred_check_branch
          %206 = sbr.rel (%p204) target = $region44
        $region43: #{tpu_custom_call.1} parent=31 // pred_region
          %207 = dma.done [#allocation6], 4096
        $region44: #{tpu_custom_call.1} parent=31 // pred_fallthru
          _
        %s208 = sand.u32 %s29, 1
        %s209 = scalar_lea.sflag [#allocation3], %s208
        %s210 = sand.u32 %s29, 1
        %s211 = smul.addr %s210, 1024
        %s212 = scalar_lea.vmem [#allocation2], %s211
        %p213 = pneg %p42
        %p214 = pneg %p39
        %p215 = pneg %p63
        %p216 = pneg %p60
        %p217 = pneg %p84
        %p218 = pneg %p81
        %p219 = pneg %p110
        %p220 = pneg %p107
        %s221 = sand.u32 %s97, 1
        %s222 = scalar_lea.sflag [#allocation4], %s221
        %s223 = sand.u32 %s97, 1
        %s224 = smul.addr %s223, 256
        %s225 = scalar_lea.vmem [#allocation8], %s224
        %s226 = smul.u32 32, %s21
        %s227 = ssub.s32 38, %s226
        %p228 = scmp.lt.s32.totalorder %s227, 32
        %s229 = scalar_select %p228, %s227, 32
        %s230 = smul.u32 128, %s229
        %s231 = smul.u32 %s230, 4
        %s232 = smul.u32 32, %s21
        %s233 = ssub.s32 38, %s232
        %p234 = scmp.lt.s32.totalorder %s233, 32
        %s235 = scalar_select %p234, %s233, 32
        %s236 = smul.u32 128, %s235
        %v238 = vld [vmem:[%s195] sm:$0xff]
        %v239 = vld [vmem:[%s195 + $0x8] sm:$0xff]
        %v240 = vld [vmem:[%s195 + $0x10] sm:$0xff]
        %v241 = vld [vmem:[%s195 + $0x18] sm:$0xff]
        %v242 = vld [vmem:[%s195 + $0x20] sm:$0xff]
        %v243 = vld [vmem:[%s195 + $0x28] sm:$0xff]
        %v244 = vld [vmem:[%s195 + $0x30] sm:$0xff]
        %v245 = vld [vmem:[%s195 + $0x38] sm:$0xff]
        %v246 = vld [vmem:[%s195 + $0x40] sm:$0xff]
        %v247 = vld [vmem:[%s195 + $0x48] sm:$0xff]
        %v248 = vld [vmem:[%s195 + $0x50] sm:$0xff]
        %v249 = vld [vmem:[%s195 + $0x58] sm:$0xff]
        %v250 = vld [vmem:[%s195 + $0x60] sm:$0xff]
        %v251 = vld [vmem:[%s195 + $0x68] sm:$0xff]
        %v252 = vld [vmem:[%s195 + $0x70] sm:$0xff]
        %v253 = vld [vmem:[%s195 + $0x78] sm:$0xff]
        %v254 = vld [vmem:[%s195 + $0x80] sm:$0xff]
        %v255 = vld [vmem:[%s195 + $0x88] sm:$0xff]
        %v256 = vld [vmem:[%s195 + $0x90] sm:$0xff]
        %v257 = vld [vmem:[%s195 + $0x98] sm:$0xff]
        %v258 = vld [vmem:[%s195 + $0xa0] sm:$0xff]
        %v259 = vld [vmem:[%s195 + $0xa8] sm:$0xff]
        %v260 = vld [vmem:[%s195 + $0xb0] sm:$0xff]
        %v261 = vld [vmem:[%s195 + $0xb8] sm:$0xff]
        %v262 = vld [vmem:[%s195 + $0xc0] sm:$0xff]
        %v263 = vld [vmem:[%s195 + $0xc8] sm:$0xff]
        %v264 = vld [vmem:[%s195 + $0xd0] sm:$0xff]
        %v265 = vld [vmem:[%s195 + $0xd8] sm:$0xff]
        %v266 = vld [vmem:[%s195 + $0xe0] sm:$0xff]
        %v267 = vld [vmem:[%s195 + $0xe8] sm:$0xff]
        %v268 = vld [vmem:[%s195 + $0xf0] sm:$0xff]
        %v269 = vld [vmem:[%s195 + $0xf8] sm:$0xff]
        %v270 = vld [vmem:[%s195 + $0x100] sm:$0xff]
        %v271 = vld [vmem:[%s195 + $0x108] sm:$0xff]
        %v272 = vld [vmem:[%s195 + $0x110] sm:$0xff]
        %v273 = vld [vmem:[%s195 + $0x118] sm:$0xff]
        %v274 = vld [vmem:[%s195 + $0x120] sm:$0xff]
        %v275 = vld [vmem:[%s195 + $0x128] sm:$0xff]
        %v276 = vld [vmem:[%s195 + $0x130] sm:$0xff]
        %v277 = vld [vmem:[%s195 + $0x138] sm:$0xff]
        %v278 = vld [vmem:[%s195 + $0x140] sm:$0xff]
        %v279 = vld [vmem:[%s195 + $0x148] sm:$0xff]
        %v280 = vld [vmem:[%s195 + $0x150] sm:$0xff]
        %v281 = vld [vmem:[%s195 + $0x158] sm:$0xff]
        %v282 = vld [vmem:[%s195 + $0x160] sm:$0xff]
        %v283 = vld [vmem:[%s195 + $0x168] sm:$0xff]
        %v284 = vld [vmem:[%s195 + $0x170] sm:$0xff]
        %v285 = vld [vmem:[%s195 + $0x178] sm:$0xff]
        %v286 = vld [vmem:[%s195 + $0x180] sm:$0xff]
        %v287 = vld [vmem:[%s195 + $0x188] sm:$0xff]
        %v288 = vld [vmem:[%s195 + $0x190] sm:$0xff]
        %v289 = vld [vmem:[%s195 + $0x198] sm:$0xff]
        %v290 = vld [vmem:[%s195 + $0x1a0] sm:$0xff]
        %v291 = vld [vmem:[%s195 + $0x1a8] sm:$0xff]
        %v292 = vld [vmem:[%s195 + $0x1b0] sm:$0xff]
        %v293 = vld [vmem:[%s195 + $0x1b8] sm:$0xff]
        %v294 = vld [vmem:[%s195 + $0x1c0] sm:$0xff]
        %v295 = vld [vmem:[%s195 + $0x1c8] sm:$0xff]
        %v296 = vld [vmem:[%s195 + $0x1d0] sm:$0xff]
        %v297 = vld [vmem:[%s195 + $0x1d8] sm:$0xff]
        %v298 = vld [vmem:[%s195 + $0x1e0] sm:$0xff]
        %v299 = vld [vmem:[%s195 + $0x1e8] sm:$0xff]
        %v300 = vld [vmem:[%s195 + $0x1f0] sm:$0xff]
        %v301 = vld [vmem:[%s195 + $0x1f8] sm:$0xff]
        %v302 = vld [vmem:[%s195 + $0x200] sm:$0xff]
        %v303 = vld [vmem:[%s195 + $0x208] sm:$0xff]
        %v304 = vld [vmem:[%s195 + $0x210] sm:$0xff]
        %v305 = vld [vmem:[%s195 + $0x218] sm:$0xff]
        %v306 = vld [vmem:[%s195 + $0x220] sm:$0xff]
        %v307 = vld [vmem:[%s195 + $0x228] sm:$0xff]
        %v308 = vld [vmem:[%s195 + $0x230] sm:$0xff]
        %v309 = vld [vmem:[%s195 + $0x238] sm:$0xff]
        %v310 = vld [vmem:[%s195 + $0x240] sm:$0xff]
        %v311 = vld [vmem:[%s195 + $0x248] sm:$0xff]
        %v312 = vld [vmem:[%s195 + $0x250] sm:$0xff]
        %v313 = vld [vmem:[%s195 + $0x258] sm:$0xff]
        %v314 = vld [vmem:[%s195 + $0x260] sm:$0xff]
        %v315 = vld [vmem:[%s195 + $0x268] sm:$0xff]
        %v316 = vld [vmem:[%s195 + $0x270] sm:$0xff]
        %v317 = vld [vmem:[%s195 + $0x278] sm:$0xff]
        %v318 = vld [vmem:[%s195 + $0x280] sm:$0xff]
        %v319 = vld [vmem:[%s195 + $0x288] sm:$0xff]
        %v320 = vld [vmem:[%s195 + $0x290] sm:$0xff]
        %v321 = vld [vmem:[%s195 + $0x298] sm:$0xff]
        %v322 = vld [vmem:[%s195 + $0x2a0] sm:$0xff]
        %v323 = vld [vmem:[%s195 + $0x2a8] sm:$0xff]
        %v324 = vld [vmem:[%s195 + $0x2b0] sm:$0xff]
        %v325 = vld [vmem:[%s195 + $0x2b8] sm:$0xff]
        %v326 = vld [vmem:[%s195 + $0x2c0] sm:$0xff]
        %v327 = vld [vmem:[%s195 + $0x2c8] sm:$0xff]
        %v328 = vld [vmem:[%s195 + $0x2d0] sm:$0xff]
        %v329 = vld [vmem:[%s195 + $0x2d8] sm:$0xff]
        %v330 = vld [vmem:[%s195 + $0x2e0] sm:$0xff]
        %v331 = vld [vmem:[%s195 + $0x2e8] sm:$0xff]
        %v332 = vld [vmem:[%s195 + $0x2f0] sm:$0xff]
        %v333 = vld [vmem:[%s195 + $0x2f8] sm:$0xff]
        %v334 = vld [vmem:[%s195 + $0x300] sm:$0xff]
        %v335 = vld [vmem:[%s195 + $0x308] sm:$0xff]
        %v336 = vld [vmem:[%s195 + $0x310] sm:$0xff]
        %v337 = vld [vmem:[%s195 + $0x318] sm:$0xff]
        %v338 = vld [vmem:[%s195 + $0x320] sm:$0xff]
        %v339 = vld [vmem:[%s195 + $0x328] sm:$0xff]
        %v340 = vld [vmem:[%s195 + $0x330] sm:$0xff]
        %v341 = vld [vmem:[%s195 + $0x338] sm:$0xff]
        %v342 = vld [vmem:[%s195 + $0x340] sm:$0xff]
        %v343 = vld [vmem:[%s195 + $0x348] sm:$0xff]
        %v344 = vld [vmem:[%s195 + $0x350] sm:$0xff]
        %v345 = vld [vmem:[%s195 + $0x358] sm:$0xff]
        %v346 = vld [vmem:[%s195 + $0x360] sm:$0xff]
        %v347 = vld [vmem:[%s195 + $0x368] sm:$0xff]
        %v348 = vld [vmem:[%s195 + $0x370] sm:$0xff]
        %v349 = vld [vmem:[%s195 + $0x378] sm:$0xff]
        %v350 = vld [vmem:[%s195 + $0x380] sm:$0xff]
        %v351 = vld [vmem:[%s195 + $0x388] sm:$0xff]
        %v352 = vld [vmem:[%s195 + $0x390] sm:$0xff]
        %v353 = vld [vmem:[%s195 + $0x398] sm:$0xff]
        %v354 = vld [vmem:[%s195 + $0x3a0] sm:$0xff]
        %v355 = vld [vmem:[%s195 + $0x3a8] sm:$0xff]
        %v356 = vld [vmem:[%s195 + $0x3b0] sm:$0xff]
        %v357 = vld [vmem:[%s195 + $0x3b8] sm:$0xff]
        %v358 = vld [vmem:[%s195 + $0x3c0] sm:$0xff]
        %v359 = vld [vmem:[%s195 + $0x3c8] sm:$0xff]
        %v360 = vld [vmem:[%s195 + $0x3d0] sm:$0xff]
        %v361 = vld [vmem:[%s195 + $0x3d8] sm:$0xff]
        %v362 = vld [vmem:[%s195 + $0x3e0] sm:$0xff]
        %v363 = vld [vmem:[%s195 + $0x3e8] sm:$0xff]
        %v364 = vld [vmem:[%s195 + $0x3f0] sm:$0xff]
        %v365 = vld [vmem:[%s195 + $0x3f8] sm:$0xff]
        %v366 = vpack.c.bf16 %v242, %v238
        %v367 = vpack.c.bf16 %v243, %v239
        %v368 = vpack.c.bf16 %v244, %v240
        %v369 = vpack.c.bf16 %v245, %v241
        %v370 = vpack.c.bf16 %v250, %v246
        %v371 = vpack.c.bf16 %v251, %v247
        %v372 = vpack.c.bf16 %v252, %v248
        %v373 = vpack.c.bf16 %v253, %v249
        %v374 = vpack.c.bf16 %v258, %v254
        %v375 = vpack.c.bf16 %v259, %v255
        %v376 = vpack.c.bf16 %v260, %v256
        %v377 = vpack.c.bf16 %v261, %v257
        %v378 = vpack.c.bf16 %v266, %v262
        %v379 = vpack.c.bf16 %v267, %v263
        %v380 = vpack.c.bf16 %v268, %v264
        %v381 = vpack.c.bf16 %v269, %v265
        %v382 = vpack.c.bf16 %v274, %v270
        %v383 = vpack.c.bf16 %v275, %v271
        %v384 = vpack.c.bf16 %v276, %v272
        %v385 = vpack.c.bf16 %v277, %v273
        %v386 = vpack.c.bf16 %v282, %v278
        %v387 = vpack.c.bf16 %v283, %v279
        %v388 = vpack.c.bf16 %v284, %v280
        %v389 = vpack.c.bf16 %v285, %v281
        %v390 = vpack.c.bf16 %v290, %v286
        %v391 = vpack.c.bf16 %v291, %v287
        %v392 = vpack.c.bf16 %v292, %v288
        %v393 = vpack.c.bf16 %v293, %v289
        %v394 = vpack.c.bf16 %v298, %v294
        %v395 = vpack.c.bf16 %v299, %v295
        %v396 = vpack.c.bf16 %v300, %v296
        %v397 = vpack.c.bf16 %v301, %v297
        %v398 = vpack.c.bf16 %v306, %v302
        %v399 = vpack.c.bf16 %v307, %v303
        %v400 = vpack.c.bf16 %v308, %v304
        %v401 = vpack.c.bf16 %v309, %v305
        %v402 = vpack.c.bf16 %v314, %v310
        %v403 = vpack.c.bf16 %v315, %v311
        %v404 = vpack.c.bf16 %v316, %v312
        %v405 = vpack.c.bf16 %v317, %v313
        %v406 = vpack.c.bf16 %v322, %v318
        %v407 = vpack.c.bf16 %v323, %v319
        %v408 = vpack.c.bf16 %v324, %v320
        %v409 = vpack.c.bf16 %v325, %v321
        %v410 = vpack.c.bf16 %v330, %v326
        %v411 = vpack.c.bf16 %v331, %v327
        %v412 = vpack.c.bf16 %v332, %v328
        %v413 = vpack.c.bf16 %v333, %v329
        %v414 = vpack.c.bf16 %v338, %v334
        %v415 = vpack.c.bf16 %v339, %v335
        %v416 = vpack.c.bf16 %v340, %v336
        %v417 = vpack.c.bf16 %v341, %v337
        %v418 = vpack.c.bf16 %v346, %v342
        %v419 = vpack.c.bf16 %v347, %v343
        %v420 = vpack.c.bf16 %v348, %v344
        %v421 = vpack.c.bf16 %v349, %v345
        %v422 = vpack.c.bf16 %v354, %v350
        %v423 = vpack.c.bf16 %v355, %v351
        %v424 = vpack.c.bf16 %v356, %v352
        %v425 = vpack.c.bf16 %v357, %v353
        %v426 = vpack.c.bf16 %v362, %v358
        %v427 = vpack.c.bf16 %v363, %v359
        %v428 = vpack.c.bf16 %v364, %v360
        %v429 = vpack.c.bf16 %v365, %v361
        %v430 = vld [vmem:[#allocation5] sm:$0xf]
        %v431 = vld [vmem:[#allocation5 + $0x4] sm:$0xf]
        %v432 = vld [vmem:[#allocation5 + $0x8] sm:$0xf]
        %v433 = vld [vmem:[#allocation5 + $0xc] sm:$0xf]
        %v434 = vld [vmem:[#allocation5 + $0x10] sm:$0xf]
        %v435 = vld [vmem:[#allocation5 + $0x14] sm:$0xf]
        %v436 = vld [vmem:[#allocation5 + $0x18] sm:$0xf]
        %v437 = vld [vmem:[#allocation5 + $0x1c] sm:$0xf]
        %v438 = vld [vmem:[#allocation5 + $0x20] sm:$0xf]
        %v439 = vld [vmem:[#allocation5 + $0x24] sm:$0xf]
        %v440 = vld [vmem:[#allocation5 + $0x28] sm:$0xf]
        %v441 = vld [vmem:[#allocation5 + $0x2c] sm:$0xf]
        %v442 = vld [vmem:[#allocation5 + $0x30] sm:$0xf]
        %v443 = vld [vmem:[#allocation5 + $0x34] sm:$0xf]
        %v444 = vld [vmem:[#allocation5 + $0x38] sm:$0xf]
        %v445 = vld [vmem:[#allocation5 + $0x3c] sm:$0xf]
        %v446 = vld [vmem:[#allocation5 + $0x40] sm:$0xf]
        %v447 = vld [vmem:[#allocation5 + $0x44] sm:$0xf]
        %v448 = vld [vmem:[#allocation5 + $0x48] sm:$0xf]
        %v449 = vld [vmem:[#allocation5 + $0x4c] sm:$0xf]
        %v450 = vld [vmem:[#allocation5 + $0x50] sm:$0xf]
        %v451 = vld [vmem:[#allocation5 + $0x54] sm:$0xf]
        %v452 = vld [vmem:[#allocation5 + $0x58] sm:$0xf]
        %v453 = vld [vmem:[#allocation5 + $0x5c] sm:$0xf]
        %v454 = vld [vmem:[#allocation5 + $0x60] sm:$0xf]
        %v455 = vld [vmem:[#allocation5 + $0x64] sm:$0xf]
        %v456 = vld [vmem:[#allocation5 + $0x68] sm:$0xf]
        %v457 = vld [vmem:[#allocation5 + $0x6c] sm:$0xf]
        %v458 = vld [vmem:[#allocation5 + $0x70] sm:$0xf]
        %v459 = vld [vmem:[#allocation5 + $0x74] sm:$0xf]
        %v460 = vld [vmem:[#allocation5 + $0x78] sm:$0xf]
        %v461 = vld [vmem:[#allocation5 + $0x7c] sm:$0xf]
        %v462 = vld [vmem:[#allocation5 + $0x80] sm:$0xf]
        %v463 = vld [vmem:[#allocation5 + $0x84] sm:$0xf]
        %v464 = vld [vmem:[#allocation5 + $0x88] sm:$0xf]
        %v465 = vld [vmem:[#allocation5 + $0x8c] sm:$0xf]
        %v466 = vld [vmem:[#allocation5 + $0x90] sm:$0xf]
        %v467 = vld [vmem:[#allocation5 + $0x94] sm:$0xf]
        %v468 = vld [vmem:[#allocation5 + $0x98] sm:$0xf]
        %v469 = vld [vmem:[#allocation5 + $0x9c] sm:$0xf]
        %v470 = vld [vmem:[#allocation5 + $0xa0] sm:$0xf]
        %v471 = vld [vmem:[#allocation5 + $0xa4] sm:$0xf]
        %v472 = vld [vmem:[#allocation5 + $0xa8] sm:$0xf]
        %v473 = vld [vmem:[#allocation5 + $0xac] sm:$0xf]
        %v474 = vld [vmem:[#allocation5 + $0xb0] sm:$0xf]
        %v475 = vld [vmem:[#allocation5 + $0xb4] sm:$0xf]
        %v476 = vld [vmem:[#allocation5 + $0xb8] sm:$0xf]
        %v477 = vld [vmem:[#allocation5 + $0xbc] sm:$0xf]
        %v478 = vld [vmem:[#allocation5 + $0xc0] sm:$0xf]
        %v479 = vld [vmem:[#allocation5 + $0xc4] sm:$0xf]
        %v480 = vld [vmem:[#allocation5 + $0xc8] sm:$0xf]
        %v481 = vld [vmem:[#allocation5 + $0xcc] sm:$0xf]
        %v482 = vld [vmem:[#allocation5 + $0xd0] sm:$0xf]
        %v483 = vld [vmem:[#allocation5 + $0xd4] sm:$0xf]
        %v484 = vld [vmem:[#allocation5 + $0xd8] sm:$0xf]
        %v485 = vld [vmem:[#allocation5 + $0xdc] sm:$0xf]
        %v486 = vld [vmem:[#allocation5 + $0xe0] sm:$0xf]
        %v487 = vld [vmem:[#allocation5 + $0xe4] sm:$0xf]
        %v488 = vld [vmem:[#allocation5 + $0xe8] sm:$0xf]
        %v489 = vld [vmem:[#allocation5 + $0xec] sm:$0xf]
        %v490 = vld [vmem:[#allocation5 + $0xf0] sm:$0xf]
        %v491 = vld [vmem:[#allocation5 + $0xf4] sm:$0xf]
        %v492 = vld [vmem:[#allocation5 + $0xf8] sm:$0xf]
        %v493 = vld [vmem:[#allocation5 + $0xfc] sm:$0xf]
        %v558 = vunpack.c.l.b16 %v430
        %v559 = vunpack.c.l.b16 %v431
        %v560 = vunpack.c.l.b16 %v432
        %v561 = vunpack.c.l.b16 %v433
        %v562 = vunpack.c.l.b16 %v434
        %v563 = vunpack.c.l.b16 %v435
        %v564 = vunpack.c.l.b16 %v436
        %v565 = vunpack.c.l.b16 %v437
        %v566 = vunpack.c.l.b16 %v438
        %v567 = vunpack.c.l.b16 %v439
        %v568 = vunpack.c.l.b16 %v440
        %v569 = vunpack.c.l.b16 %v441
        %v570 = vunpack.c.l.b16 %v442
        %v571 = vunpack.c.l.b16 %v443
        %v572 = vunpack.c.l.b16 %v444
        %v573 = vunpack.c.l.b16 %v445
        %v574 = vunpack.c.l.b16 %v446
        %v575 = vunpack.c.l.b16 %v447
        %v576 = vunpack.c.l.b16 %v448
        %v577 = vunpack.c.l.b16 %v449
        %v578 = vunpack.c.l.b16 %v450
        %v579 = vunpack.c.l.b16 %v451
        %v580 = vunpack.c.l.b16 %v452
        %v581 = vunpack.c.l.b16 %v453
        %v582 = vunpack.c.l.b16 %v454
        %v583 = vunpack.c.l.b16 %v455
        %v584 = vunpack.c.l.b16 %v456
        %v585 = vunpack.c.l.b16 %v457
        %v586 = vunpack.c.l.b16 %v458
        %v587 = vunpack.c.l.b16 %v459
        %v588 = vunpack.c.l.b16 %v460
        %v589 = vunpack.c.l.b16 %v461
        %v590 = vunpack.c.l.b16 %v462
        %v591 = vunpack.c.l.b16 %v463
        %v592 = vunpack.c.l.b16 %v464
        %v593 = vunpack.c.l.b16 %v465
        %v594 = vunpack.c.l.b16 %v466
        %v595 = vunpack.c.l.b16 %v467
        %v596 = vunpack.c.l.b16 %v468
        %v597 = vunpack.c.l.b16 %v469
        %v598 = vunpack.c.l.b16 %v470
        %v599 = vunpack.c.l.b16 %v471
        %v600 = vunpack.c.l.b16 %v472
        %v601 = vunpack.c.l.b16 %v473
        %v602 = vunpack.c.l.b16 %v474
        %v603 = vunpack.c.l.b16 %v475
        %v604 = vunpack.c.l.b16 %v476
        %v605 = vunpack.c.l.b16 %v477
        %v606 = vunpack.c.l.b16 %v478
        %v607 = vunpack.c.l.b16 %v479
        %v608 = vunpack.c.l.b16 %v480
        %v609 = vunpack.c.l.b16 %v481
        %v610 = vunpack.c.l.b16 %v482
        %v611 = vunpack.c.l.b16 %v483
        %v612 = vunpack.c.l.b16 %v484
        %v613 = vunpack.c.l.b16 %v485
        %v614 = vunpack.c.l.b16 %v486
        %v615 = vunpack.c.l.b16 %v487
        %v616 = vunpack.c.l.b16 %v488
        %v617 = vunpack.c.l.b16 %v489
        %v618 = vunpack.c.l.b16 %v490
        %v619 = vunpack.c.l.b16 %v491
        %v620 = vunpack.c.l.b16 %v492
        %v621 = vunpack.c.l.b16 %v493
        %v622 = vpack.c.b16 %v559, %v558
        %v623 = vpack.c.b16 %v561, %v560
        %v624 = vpack.c.b16 %v563, %v562
        %v625 = vpack.c.b16 %v565, %v564
        %v626 = vpack.c.b16 %v567, %v566
        %v627 = vpack.c.b16 %v569, %v568
        %v628 = vpack.c.b16 %v571, %v570
        %v629 = vpack.c.b16 %v573, %v572
        %v630 = vpack.c.b16 %v575, %v574
        %v631 = vpack.c.b16 %v577, %v576
        %v632 = vpack.c.b16 %v579, %v578
        %v633 = vpack.c.b16 %v581, %v580
        %v634 = vpack.c.b16 %v583, %v582
        %v635 = vpack.c.b16 %v585, %v584
        %v636 = vpack.c.b16 %v587, %v586
        %v637 = vpack.c.b16 %v589, %v588
        %v638 = vpack.c.b16 %v591, %v590
        %v639 = vpack.c.b16 %v593, %v592
        %v640 = vpack.c.b16 %v595, %v594
        %v641 = vpack.c.b16 %v597, %v596
        %v642 = vpack.c.b16 %v599, %v598
        %v643 = vpack.c.b16 %v601, %v600
        %v644 = vpack.c.b16 %v603, %v602
        %v645 = vpack.c.b16 %v605, %v604
        %v646 = vpack.c.b16 %v607, %v606
        %v647 = vpack.c.b16 %v609, %v608
        %v648 = vpack.c.b16 %v611, %v610
        %v649 = vpack.c.b16 %v613, %v612
        %v650 = vpack.c.b16 %v615, %v614
        %v651 = vpack.c.b16 %v617, %v616
        %v652 = vpack.c.b16 %v619, %v618
        %v653 = vpack.c.b16 %v621, %v620
        %686 = vmatprep.subr.bf16.mxu0 0
        %687 = vmatpush1.bf16.msra.mxu0 %v622
        %688 = vmatprep.subr.bf16.mxu0 0
        %689 = vmatpush1.bf16.msra.mxu0 %v623
        %690 = vmatprep.subr.bf16.mxu0 0
        %691 = vmatpush1.bf16.msra.mxu0 %v624
        %692 = vmatprep.subr.bf16.mxu0 0
        %693 = vmatpush1.bf16.msra.mxu0 %v625
        %694 = vmatprep.subr.bf16.mxu0 0
        %695 = vmatpush1.bf16.msra.mxu0 %v626
        %696 = vmatprep.subr.bf16.mxu0 0
        %697 = vmatpush1.bf16.msra.mxu0 %v627
        %698 = vmatprep.subr.bf16.mxu0 0
        %699 = vmatpush1.bf16.msra.mxu0 %v628
        %700 = vmatprep.subr.bf16.mxu0 0
        %701 = vmatpush1.bf16.msra.mxu0 %v629
        %702 = vmatprep.subr.bf16.mxu0 0
        %703 = vmatpush1.bf16.msra.mxu0 %v630
        %704 = vmatprep.subr.bf16.mxu0 0
        %705 = vmatpush1.bf16.msra.mxu0 %v631
        %706 = vmatprep.subr.bf16.mxu0 0
        %707 = vmatpush1.bf16.msra.mxu0 %v632
        %708 = vmatprep.subr.bf16.mxu0 0
        %709 = vmatpush1.bf16.msra.mxu0 %v633
        %710 = vmatprep.subr.bf16.mxu0 0
        %711 = vmatpush1.bf16.msra.mxu0 %v634
        %712 = vmatprep.subr.bf16.mxu0 0
        %713 = vmatpush1.bf16.msra.mxu0 %v635
        %714 = vmatprep.subr.bf16.mxu0 0
        %715 = vmatpush1.bf16.msra.mxu0 %v636
        %716 = vmatprep.subr.bf16.mxu0 0
        %717 = vmatpush1.bf16.msra.mxu0 %v637
        %718 = vmatprep.mubr.bf16.mxu0 %v367
        %719 = vmatmul.mubr.bf16.gmra.mrb[0].mxu0 %v366
        %v720 = vpop.f32.mrb[0].mxu0
        %v721 = vadd.f32 0.0, %v720
        %v722 = vpop.f32.mrb[0].mxu0
        %v723 = vpop.f32.mrb[0].mxu0
        %v724 = vadd.f32 0.0, %v723
        %v725 = vpop.f32.mrb[0].mxu0
        %726 = vmatprep.mubr.bf16.mxu0 %v371
        %727 = vmatmul.mubr.bf16.gmra.mrb[0].mxu0 %v370
        %v728 = vpop.f32.mrb[0].mxu0
        %v729 = vadd.f32 0.0, %v728
        %v730 = vpop.f32.mrb[0].mxu0
        %v731 = vpop.f32.mrb[0].mxu0
        %v732 = vadd.f32 0.0, %v731
        %v733 = vpop.f32.mrb[0].mxu0
        %734 = vmatprep.mubr.bf16.mxu0 %v375
        %735 = vmatmul.mubr.bf16.gmra.mrb[0].mxu0 %v374
        %v736 = vpop.f32.mrb[0].mxu0
        %v737 = vadd.f32 0.0, %v736
        %v738 = vpop.f32.mrb[0].mxu0
        %v739 = vpop.f32.mrb[0].mxu0
        %v740 = vadd.f32 0.0, %v739
        %v741 = vpop.f32.mrb[0].mxu0
        %742 = vmatprep.mubr.bf16.mxu0 %v379
        %743 = vmatmul.mubr.bf16.gmra.mrb[0].mxu0 %v378
        %v744 = vpop.f32.mrb[0].mxu0
        %v745 = vadd.f32 0.0, %v744
        %v746 = vpop.f32.mrb[0].mxu0
        %v747 = vpop.f32.mrb[0].mxu0
        %v748 = vadd.f32 0.0, %v747
        %v749 = vpop.f32.mrb[0].mxu0
        %750 = vmatprep.mubr.bf16.mxu0 %v383
        %751 = vmatmul.mubr.bf16.gmra.mrb[0].mxu0 %v382
        %v752 = vpop.f32.mrb[0].mxu0
        %v753 = vadd.f32 0.0, %v752
        %v754 = vpop.f32.mrb[0].mxu0
        %v755 = vpop.f32.mrb[0].mxu0
        %v756 = vadd.f32 0.0, %v755
        %v757 = vpop.f32.mrb[0].mxu0
        %758 = vmatprep.mubr.bf16.mxu0 %v387
        %759 = vmatmul.mubr.bf16.gmra.mrb[0].mxu0 %v386
        %v760 = vpop.f32.mrb[0].mxu0
        %v761 = vadd.f32 0.0, %v760
        %v762 = vpop.f32.mrb[0].mxu0
        %v763 = vpop.f32.mrb[0].mxu0
        %v764 = vadd.f32 0.0, %v763
        %v765 = vpop.f32.mrb[0].mxu0
        %766 = vmatprep.mubr.bf16.mxu0 %v391
        %767 = vmatmul.mubr.bf16.gmra.mrb[0].mxu0 %v390
        %v768 = vpop.f32.mrb[0].mxu0
        %v769 = vadd.f32 0.0, %v768
        %v770 = vpop.f32.mrb[0].mxu0
        %v771 = vpop.f32.mrb[0].mxu0
        %v772 = vadd.f32 0.0, %v771
        %v773 = vpop.f32.mrb[0].mxu0
        %774 = vmatprep.mubr.bf16.mxu0 %v395
        %775 = vmatmul.mubr.bf16.gmra.mrb[0].mxu0 %v394
        %v776 = vpop.f32.mrb[0].mxu0
        %v777 = vadd.f32 0.0, %v776
        %v778 = vpop.f32.mrb[0].mxu0
        %v779 = vpop.f32.mrb[0].mxu0
        %v780 = vadd.f32 0.0, %v779
        %v781 = vpop.f32.mrb[0].mxu0
        %782 = vmatprep.mubr.bf16.mxu0 %v399
        %783 = vmatmul.mubr.bf16.gmra.mrb[0].mxu0 %v398
        %v784 = vpop.f32.mrb[0].mxu0
        %v785 = vadd.f32 0.0, %v784
        %v786 = vpop.f32.mrb[0].mxu0
        %v787 = vpop.f32.mrb[0].mxu0
        %v788 = vadd.f32 0.0, %v787
        %v789 = vpop.f32.mrb[0].mxu0
        %790 = vmatprep.mubr.bf16.mxu0 %v403
        %791 = vmatmul.mubr.bf16.gmra.mrb[0].mxu0 %v402
        %v792 = vpop.f32.mrb[0].mxu0
        %v793 = vadd.f32 0.0, %v792
        %v794 = vpop.f32.mrb[0].mxu0
        %v795 = vpop.f32.mrb[0].mxu0
        %v796 = vadd.f32 0.0, %v795
        %v797 = vpop.f32.mrb[0].mxu0
        %798 = vmatprep.mubr.bf16.mxu0 %v407
        %799 = vmatmul.mubr.bf16.gmra.mrb[0].mxu0 %v406
        %v800 = vpop.f32.mrb[0].mxu0
        %v801 = vadd.f32 0.0, %v800
        %v802 = vpop.f32.mrb[0].mxu0
        %v803 = vpop.f32.mrb[0].mxu0
        %v804 = vadd.f32 0.0, %v803
        %v805 = vpop.f32.mrb[0].mxu0
        %806 = vmatprep.mubr.bf16.mxu0 %v411
        %807 = vmatmul.mubr.bf16.gmra.mrb[0].mxu0 %v410
        %v808 = vpop.f32.mrb[0].mxu0
        %v809 = vadd.f32 0.0, %v808
        %v810 = vpop.f32.mrb[0].mxu0
        %v811 = vpop.f32.mrb[0].mxu0
        %v812 = vadd.f32 0.0, %v811
        %v813 = vpop.f32.mrb[0].mxu0
        %814 = vmatprep.mubr.bf16.mxu0 %v415
        %815 = vmatmul.mubr.bf16.gmra.mrb[0].mxu0 %v414
        %v816 = vpop.f32.mrb[0].mxu0
        %v817 = vadd.f32 0.0, %v816
        %v818 = vpop.f32.mrb[0].mxu0
        %v819 = vpop.f32.mrb[0].mxu0
        %v820 = vadd.f32 0.0, %v819
        %v821 = vpop.f32.mrb[0].mxu0
        %822 = vmatprep.mubr.bf16.mxu0 %v419
        %823 = vmatmul.mubr.bf16.gmra.mrb[0].mxu0 %v418
        %v824 = vpop.f32.mrb[0].mxu0
        %v825 = vadd.f32 0.0, %v824
        %v826 = vpop.f32.mrb[0].mxu0
        %v827 = vpop.f32.mrb[0].mxu0
        %v828 = vadd.f32 0.0, %v827
        %v829 = vpop.f32.mrb[0].mxu0
        %830 = vmatprep.mubr.bf16.mxu0 %v423
        %831 = vmatmul.mubr.bf16.gmra.mrb[0].mxu0 %v422
        %v832 = vpop.f32.mrb[0].mxu0
        %v833 = vadd.f32 0.0, %v832
        %v834 = vpop.f32.mrb[0].mxu0
        %v835 = vpop.f32.mrb[0].mxu0
        %v836 = vadd.f32 0.0, %v835
        %v837 = vpop.f32.mrb[0].mxu0
        %838 = vmatprep.mubr.bf16.mxu0 %v427
        %839 = vmatmul.mubr.bf16.gmra.mrb[0].mxu0 %v426
        %v840 = vpop.f32.mrb[0].mxu0
        %v841 = vadd.f32 0.0, %v840
        %v842 = vpop.f32.mrb[0].mxu0
        %v843 = vpop.f32.mrb[0].mxu0
        %v844 = vadd.f32 0.0, %v843
        %v845 = vpop.f32.mrb[0].mxu0
        %846 = vdwg.mxu0
        %847 = vmatprep.subr.bf16.mxu0 0
        %848 = vmatpush1.bf16.msra.mxu0 %v638
        %849 = vmatprep.subr.bf16.mxu0 0
        %850 = vmatpush1.bf16.msra.mxu0 %v639
        %851 = vmatprep.subr.bf16.mxu0 0
        %852 = vmatpush1.bf16.msra.mxu0 %v640
        %853 = vmatprep.subr.bf16.mxu0 0
        %854 = vmatpush1.bf16.msra.mxu0 %v641
        %855 = vmatprep.subr.bf16.mxu0 0
        %856 = vmatpush1.bf16.msra.mxu0 %v642
        %857 = vmatprep.subr.bf16.mxu0 0
        %858 = vmatpush1.bf16.msra.mxu0 %v643
        %859 = vmatprep.subr.bf16.mxu0 0
        %860 = vmatpush1.bf16.msra.mxu0 %v644
        %861 = vmatprep.subr.bf16.mxu0 0
        %862 = vmatpush1.bf16.msra.mxu0 %v645
        %863 = vmatprep.subr.bf16.mxu0 0
        %864 = vmatpush1.bf16.msra.mxu0 %v646
        %865 = vmatprep.subr.bf16.mxu0 0
        %866 = vmatpush1.bf16.msra.mxu0 %v647
        %867 = vmatprep.subr.bf16.mxu0 0
        %868 = vmatpush1.bf16.msra.mxu0 %v648
        %869 = vmatprep.subr.bf16.mxu0 0
        %870 = vmatpush1.bf16.msra.mxu0 %v649
        %871 = vmatprep.subr.bf16.mxu0 0
        %872 = vmatpush1.bf16.msra.mxu0 %v650
        %873 = vmatprep.subr.bf16.mxu0 0
        %874 = vmatpush1.bf16.msra.mxu0 %v651
        %875 = vmatprep.subr.bf16.mxu0 0
        %876 = vmatpush1.bf16.msra.mxu0 %v652
        %877 = vmatprep.subr.bf16.mxu0 0
        %878 = vmatpush1.bf16.msra.mxu0 %v653
        %879 = vmatprep.mubr.bf16.mxu0 %v369
        %880 = vmatmul.mubr.bf16.gmra.mrb[0].mxu0 %v368
        %v881 = vpop.f32.mrb[0].mxu0
        %v882 = vadd.f32 %v721, %v881
        %v883 = vpop.f32.mrb[0].mxu0
        %v884 = vpop.f32.mrb[0].mxu0
        %v885 = vadd.f32 %v724, %v884
        %v886 = vpop.f32.mrb[0].mxu0
        %887 = vmatprep.mubr.bf16.mxu0 %v373
        %888 = vmatmul.mubr.bf16.gmra.mrb[0].mxu0 %v372
        %v889 = vpop.f32.mrb[0].mxu0
        %v890 = vadd.f32 %v729, %v889
        %v891 = vpop.f32.mrb[0].mxu0
        %v892 = vpop.f32.mrb[0].mxu0
        %v893 = vadd.f32 %v732, %v892
        %v894 = vpop.f32.mrb[0].mxu0
        %895 = vmatprep.mubr.bf16.mxu0 %v377
        %896 = vmatmul.mubr.bf16.gmra.mrb[0].mxu0 %v376
        %v897 = vpop.f32.mrb[0].mxu0
        %v898 = vadd.f32 %v737, %v897
        %v899 = vpop.f32.mrb[0].mxu0
        %v900 = vpop.f32.mrb[0].mxu0
        %v901 = vadd.f32 %v740, %v900
        %v902 = vpop.f32.mrb[0].mxu0
        %903 = vmatprep.mubr.bf16.mxu0 %v381
        %904 = vmatmul.mubr.bf16.gmra.mrb[0].mxu0 %v380
        %v905 = vpop.f32.mrb[0].mxu0
        %v906 = vadd.f32 %v745, %v905
        %v907 = vpop.f32.mrb[0].mxu0
        %v908 = vpop.f32.mrb[0].mxu0
        %v909 = vadd.f32 %v748, %v908
        %v910 = vpop.f32.mrb[0].mxu0
        %911 = vmatprep.mubr.bf16.mxu0 %v385
        %912 = vmatmul.mubr.bf16.gmra.mrb[0].mxu0 %v384
        %v913 = vpop.f32.mrb[0].mxu0
        %v914 = vadd.f32 %v753, %v913
        %v915 = vpop.f32.mrb[0].mxu0
        %v916 = vpop.f32.mrb[0].mxu0
        %v917 = vadd.f32 %v756, %v916
        %v918 = vpop.f32.mrb[0].mxu0
        %919 = vmatprep.mubr.bf16.mxu0 %v389
        %920 = vmatmul.mubr.bf16.gmra.mrb[0].mxu0 %v388
        %v921 = vpop.f32.mrb[0].mxu0
        %v922 = vadd.f32 %v761, %v921
        %v923 = vpop.f32.mrb[0].mxu0
        %v924 = vpop.f32.mrb[0].mxu0
        %v925 = vadd.f32 %v764, %v924
        %v926 = vpop.f32.mrb[0].mxu0
        %927 = vmatprep.mubr.bf16.mxu0 %v393
        %928 = vmatmul.mubr.bf16.gmra.mrb[0].mxu0 %v392
        %v929 = vpop.f32.mrb[0].mxu0
        %v930 = vadd.f32 %v769, %v929
        %v931 = vpop.f32.mrb[0].mxu0
        %v932 = vpop.f32.mrb[0].mxu0
        %v933 = vadd.f32 %v772, %v932
        %v934 = vpop.f32.mrb[0].mxu0
        %935 = vmatprep.mubr.bf16.mxu0 %v397
        %936 = vmatmul.mubr.bf16.gmra.mrb[0].mxu0 %v396
        %v937 = vpop.f32.mrb[0].mxu0
        %v938 = vadd.f32 %v777, %v937
        %v939 = vpop.f32.mrb[0].mxu0
        %v940 = vpop.f32.mrb[0].mxu0
        %v941 = vadd.f32 %v780, %v940
        %v942 = vpop.f32.mrb[0].mxu0
        %943 = vmatprep.mubr.bf16.mxu0 %v401
        %944 = vmatmul.mubr.bf16.gmra.mrb[0].mxu0 %v400
        %v945 = vpop.f32.mrb[0].mxu0
        %v946 = vadd.f32 %v785, %v945
        %v947 = vpop.f32.mrb[0].mxu0
        %v948 = vpop.f32.mrb[0].mxu0
        %v949 = vadd.f32 %v788, %v948
        %v950 = vpop.f32.mrb[0].mxu0
        %951 = vmatprep.mubr.bf16.mxu0 %v405
        %952 = vmatmul.mubr.bf16.gmra.mrb[0].mxu0 %v404
        %v953 = vpop.f32.mrb[0].mxu0
        %v954 = vadd.f32 %v793, %v953
        %v955 = vpop.f32.mrb[0].mxu0
        %v956 = vpop.f32.mrb[0].mxu0
        %v957 = vadd.f32 %v796, %v956
        %v958 = vpop.f32.mrb[0].mxu0
        %959 = vmatprep.mubr.bf16.mxu0 %v409
        %960 = vmatmul.mubr.bf16.gmra.mrb[0].mxu0 %v408
        %v961 = vpop.f32.mrb[0].mxu0
        %v962 = vadd.f32 %v801, %v961
        %v963 = vpop.f32.mrb[0].mxu0
        %v964 = vpop.f32.mrb[0].mxu0
        %v965 = vadd.f32 %v804, %v964
        %v966 = vpop.f32.mrb[0].mxu0
        %967 = vmatprep.mubr.bf16.mxu0 %v413
        %968 = vmatmul.mubr.bf16.gmra.mrb[0].mxu0 %v412
        %v969 = vpop.f32.mrb[0].mxu0
        %v970 = vadd.f32 %v809, %v969
        %v971 = vpop.f32.mrb[0].mxu0
        %v972 = vpop.f32.mrb[0].mxu0
        %v973 = vadd.f32 %v812, %v972
        %v974 = vpop.f32.mrb[0].mxu0
        %975 = vmatprep.mubr.bf16.mxu0 %v417
        %976 = vmatmul.mubr.bf16.gmra.mrb[0].mxu0 %v416
        %v977 = vpop.f32.mrb[0].mxu0
        %v978 = vadd.f32 %v817, %v977
        %v979 = vpop.f32.mrb[0].mxu0
        %v980 = vpop.f32.mrb[0].mxu0
        %v981 = vadd.f32 %v820, %v980
        %v982 = vpop.f32.mrb[0].mxu0
        %983 = vmatprep.mubr.bf16.mxu0 %v421
        %984 = vmatmul.mubr.bf16.gmra.mrb[0].mxu0 %v420
        %v985 = vpop.f32.mrb[0].mxu0
        %v986 = vadd.f32 %v825, %v985
        %v987 = vpop.f32.mrb[0].mxu0
        %v988 = vpop.f32.mrb[0].mxu0
        %v989 = vadd.f32 %v828, %v988
        %v990 = vpop.f32.mrb[0].mxu0
        %991 = vmatprep.mubr.bf16.mxu0 %v425
        %992 = vmatmul.mubr.bf16.gmra.mrb[0].mxu0 %v424
        %v993 = vpop.f32.mrb[0].mxu0
        %v994 = vadd.f32 %v833, %v993
        %v995 = vpop.f32.mrb[0].mxu0
        %v996 = vpop.f32.mrb[0].mxu0
        %v997 = vadd.f32 %v836, %v996
        %v998 = vpop.f32.mrb[0].mxu0
        %999 = vmatprep.mubr.bf16.mxu0 %v429
        %1000 = vmatmul.mubr.bf16.gmra.mrb[0].mxu0 %v428
        %v1001 = vpop.f32.mrb[0].mxu0
        %v1002 = vadd.f32 %v841, %v1001
        %v1003 = vpop.f32.mrb[0].mxu0
        %v1004 = vpop.f32.mrb[0].mxu0
        %v1005 = vadd.f32 %v844, %v1004
        %v1006 = vpop.f32.mrb[0].mxu0
        %1007 = vdwg.mxu0
        %v1008 = vmul.f32 %v882, 0.8333333
        %v1009 = vmul.f32 %v885, 0.8333333
        %v1010 = vmul.f32 %v890, 0.8333333
        %v1011 = vmul.f32 %v893, 0.8333333
        %v1012 = vmul.f32 %v898, 0.8333333
        %v1013 = vmul.f32 %v901, 0.8333333
        %v1014 = vmul.f32 %v906, 0.8333333
        %v1015 = vmul.f32 %v909, 0.8333333
        %v1016 = vmul.f32 %v914, 0.8333333
        %v1017 = vmul.f32 %v917, 0.8333333
        %v1018 = vmul.f32 %v922, 0.8333333
        %v1019 = vmul.f32 %v925, 0.8333333
        %v1020 = vmul.f32 %v930, 0.8333333
        %v1021 = vmul.f32 %v933, 0.8333333
        %v1022 = vmul.f32 %v938, 0.8333333
        %v1023 = vmul.f32 %v941, 0.8333333
        %v1024 = vmul.f32 %v946, 0.8333333
        %v1025 = vmul.f32 %v949, 0.8333333
        %v1026 = vmul.f32 %v954, 0.8333333
        %v1027 = vmul.f32 %v957, 0.8333333
        %v1028 = vmul.f32 %v962, 0.8333333
        %v1029 = vmul.f32 %v965, 0.8333333
        %v1030 = vmul.f32 %v970, 0.8333333
        %v1031 = vmul.f32 %v973, 0.8333333
        %v1032 = vmul.f32 %v978, 0.8333333
        %v1033 = vmul.f32 %v981, 0.8333333
        %v1034 = vmul.f32 %v986, 0.8333333
        %v1035 = vmul.f32 %v989, 0.8333333
        %v1036 = vmul.f32 %v994, 0.8333333
        %v1037 = vmul.f32 %v997, 0.8333333
        %v1038 = vmul.f32 %v1002, 0.8333333
        %v1039 = vmul.f32 %v1005, 0.8333333
        %v1040 = vmul.f32 %v882, 0.5
        %v1041 = vmul.f32 %v885, 0.5
        %v1042 = vmul.f32 %v890, 0.5
        %v1043 = vmul.f32 %v893, 0.5
        %v1044 = vmul.f32 %v898, 0.5
        %v1045 = vmul.f32 %v901, 0.5
        %v1046 = vmul.f32 %v906, 0.5
        %v1047 = vmul.f32 %v909, 0.5
        %v1048 = vmul.f32 %v914, 0.5
        %v1049 = vmul.f32 %v917, 0.5
        %v1050 = vmul.f32 %v922, 0.5
        %v1051 = vmul.f32 %v925, 0.5
        %v1052 = vmul.f32 %v930, 0.5
        %v1053 = vmul.f32 %v933, 0.5
        %v1054 = vmul.f32 %v938, 0.5
        %v1055 = vmul.f32 %v941, 0.5
        %v1056 = vmul.f32 %v946, 0.5
        %v1057 = vmul.f32 %v949, 0.5
        %v1058 = vmul.f32 %v954, 0.5
        %v1059 = vmul.f32 %v957, 0.5
        %v1060 = vmul.f32 %v962, 0.5
        %v1061 = vmul.f32 %v965, 0.5
        %v1062 = vmul.f32 %v970, 0.5
        %v1063 = vmul.f32 %v973, 0.5
        %v1064 = vmul.f32 %v978, 0.5
        %v1065 = vmul.f32 %v981, 0.5
        %v1066 = vmul.f32 %v986, 0.5
        %v1067 = vmul.f32 %v989, 0.5
        %v1068 = vmul.f32 %v994, 0.5
        %v1069 = vmul.f32 %v997, 0.5
        %v1070 = vmul.f32 %v1002, 0.5
        %v1071 = vmul.f32 %v1005, 0.5
        %v1072 = vtanh.pop %v1040
        %v1073 = vtanh.pop %v1041
        %v1074 = vtanh.pop %v1042
        %v1075 = vtanh.pop %v1043
        %v1076 = vtanh.pop %v1044
        %v1077 = vtanh.pop %v1045
        %v1078 = vtanh.pop %v1046
        %v1079 = vtanh.pop %v1047
        %v1080 = vtanh.pop %v1048
        %v1081 = vtanh.pop %v1049
        %v1082 = vtanh.pop %v1050
        %v1083 = vtanh.pop %v1051
        %v1084 = vtanh.pop %v1052
        %v1085 = vtanh.pop %v1053
        %v1086 = vtanh.pop %v1054
        %v1087 = vtanh.pop %v1055
        %v1088 = vtanh.pop %v1056
        %v1089 = vtanh.pop %v1057
        %v1090 = vtanh.pop %v1058
        %v1091 = vtanh.pop %v1059
        %v1092 = vtanh.pop %v1060
        %v1093 = vtanh.pop %v1061
        %v1094 = vtanh.pop %v1062
        %v1095 = vtanh.pop %v1063
        %v1096 = vtanh.pop %v1064
        %v1097 = vtanh.pop %v1065
        %v1098 = vtanh.pop %v1066
        %v1099 = vtanh.pop %v1067
        %v1100 = vtanh.pop %v1068
        %v1101 = vtanh.pop %v1069
        %v1102 = vtanh.pop %v1070
        %v1103 = vtanh.pop %v1071
        %v1104 = vadd.f32 %v1072, 1.0
        %v1105 = vadd.f32 %v1073, 1.0
        %v1106 = vadd.f32 %v1074, 1.0
        %v1107 = vadd.f32 %v1075, 1.0
        %v1108 = vadd.f32 %v1076, 1.0
        %v1109 = vadd.f32 %v1077, 1.0
        %v1110 = vadd.f32 %v1078, 1.0
        %v1111 = vadd.f32 %v1079, 1.0
        %v1112 = vadd.f32 %v1080, 1.0
        %v1113 = vadd.f32 %v1081, 1.0
        %v1114 = vadd.f32 %v1082, 1.0
        %v1115 = vadd.f32 %v1083, 1.0
        %v1116 = vadd.f32 %v1084, 1.0
        %v1117 = vadd.f32 %v1085, 1.0
        %v1118 = vadd.f32 %v1086, 1.0
        %v1119 = vadd.f32 %v1087, 1.0
        %v1120 = vadd.f32 %v1088, 1.0
        %v1121 = vadd.f32 %v1089, 1.0
        %v1122 = vadd.f32 %v1090, 1.0
        %v1123 = vadd.f32 %v1091, 1.0
        %v1124 = vadd.f32 %v1092, 1.0
        %v1125 = vadd.f32 %v1093, 1.0
        %v1126 = vadd.f32 %v1094, 1.0
        %v1127 = vadd.f32 %v1095, 1.0
        %v1128 = vadd.f32 %v1096, 1.0
        %v1129 = vadd.f32 %v1097, 1.0
        %v1130 = vadd.f32 %v1098, 1.0
        %v1131 = vadd.f32 %v1099, 1.0
        %v1132 = vadd.f32 %v1100, 1.0
        %v1133 = vadd.f32 %v1101, 1.0
        %v1134 = vadd.f32 %v1102, 1.0
        %v1135 = vadd.f32 %v1103, 1.0
        %v1136 = vmul.f32 %v1008, %v1104
        %v1137 = vmul.f32 %v1009, %v1105
        %v1138 = vmul.f32 %v1010, %v1106
        %v1139 = vmul.f32 %v1011, %v1107
        %v1140 = vmul.f32 %v1012, %v1108
        %v1141 = vmul.f32 %v1013, %v1109
        %v1142 = vmul.f32 %v1014, %v1110
        %v1143 = vmul.f32 %v1015, %v1111
        %v1144 = vmul.f32 %v1016, %v1112
        %v1145 = vmul.f32 %v1017, %v1113
        %v1146 = vmul.f32 %v1018, %v1114
        %v1147 = vmul.f32 %v1019, %v1115
        %v1148 = vmul.f32 %v1020, %v1116
        %v1149 = vmul.f32 %v1021, %v1117
        %v1150 = vmul.f32 %v1022, %v1118
        %v1151 = vmul.f32 %v1023, %v1119
        %v1152 = vmul.f32 %v1024, %v1120
        %v1153 = vmul.f32 %v1025, %v1121
        %v1154 = vmul.f32 %v1026, %v1122
        %v1155 = vmul.f32 %v1027, %v1123
        %v1156 = vmul.f32 %v1028, %v1124
        %v1157 = vmul.f32 %v1029, %v1125
        %v1158 = vmul.f32 %v1030, %v1126
        %v1159 = vmul.f32 %v1031, %v1127
        %v1160 = vmul.f32 %v1032, %v1128
        %v1161 = vmul.f32 %v1033, %v1129
        %v1162 = vmul.f32 %v1034, %v1130
        %v1163 = vmul.f32 %v1035, %v1131
        %v1164 = vmul.f32 %v1036, %v1132
        %v1165 = vmul.f32 %v1037, %v1133
        %v1166 = vmul.f32 %v1038, %v1134
        %v1167 = vmul.f32 %v1039, %v1135
        %v1168 = vld [vmem:[#allocation7] sm:$0xf]
        %v1169 = vld [vmem:[#allocation7 + $0x4] sm:$0xf]
        %v1170 = vld [vmem:[#allocation7 + $0x8] sm:$0xf]
        %v1171 = vld [vmem:[#allocation7 + $0xc] sm:$0xf]
        %v1172 = vld [vmem:[#allocation7 + $0x10] sm:$0xf]
        %v1173 = vld [vmem:[#allocation7 + $0x14] sm:$0xf]
        %v1174 = vld [vmem:[#allocation7 + $0x18] sm:$0xf]
        %v1175 = vld [vmem:[#allocation7 + $0x1c] sm:$0xf]
        %v1176 = vld [vmem:[#allocation7 + $0x20] sm:$0xf]
        %v1177 = vld [vmem:[#allocation7 + $0x24] sm:$0xf]
        %v1178 = vld [vmem:[#allocation7 + $0x28] sm:$0xf]
        %v1179 = vld [vmem:[#allocation7 + $0x2c] sm:$0xf]
        %v1180 = vld [vmem:[#allocation7 + $0x30] sm:$0xf]
        %v1181 = vld [vmem:[#allocation7 + $0x34] sm:$0xf]
        %v1182 = vld [vmem:[#allocation7 + $0x38] sm:$0xf]
        %v1183 = vld [vmem:[#allocation7 + $0x3c] sm:$0xf]
        %s1184 = scalar_lea.vmem [#allocation7], 64
        %v1185 = vld [vmem:[%s1184] sm:$0xf]
        %v1186 = vld [vmem:[%s1184 + $0x4] sm:$0xf]
        %v1187 = vld [vmem:[%s1184 + $0x8] sm:$0xf]
        %v1188 = vld [vmem:[%s1184 + $0xc] sm:$0xf]
        %v1189 = vld [vmem:[%s1184 + $0x10] sm:$0xf]
        %v1190 = vld [vmem:[%s1184 + $0x14] sm:$0xf]
        %v1191 = vld [vmem:[%s1184 + $0x18] sm:$0xf]
        %v1192 = vld [vmem:[%s1184 + $0x1c] sm:$0xf]
        %v1193 = vld [vmem:[%s1184 + $0x20] sm:$0xf]
        %v1194 = vld [vmem:[%s1184 + $0x24] sm:$0xf]
        %v1195 = vld [vmem:[%s1184 + $0x28] sm:$0xf]
        %v1196 = vld [vmem:[%s1184 + $0x2c] sm:$0xf]
        %v1197 = vld [vmem:[%s1184 + $0x30] sm:$0xf]
        %v1198 = vld [vmem:[%s1184 + $0x34] sm:$0xf]
        %v1199 = vld [vmem:[%s1184 + $0x38] sm:$0xf]
        %v1200 = vld [vmem:[%s1184 + $0x3c] sm:$0xf]
        %v1201 = vpack.c.bf16 %v1137, %v1136
        %v1202 = vpack.c.bf16 %v1139, %v1138
        %v1203 = vpack.c.bf16 %v1141, %v1140
        %v1204 = vpack.c.bf16 %v1143, %v1142
        %v1205 = vpack.c.bf16 %v1145, %v1144
        %v1206 = vpack.c.bf16 %v1147, %v1146
        %v1207 = vpack.c.bf16 %v1149, %v1148
        %v1208 = vpack.c.bf16 %v1151, %v1150
        %v1209 = vpack.c.bf16 %v1153, %v1152
        %v1210 = vpack.c.bf16 %v1155, %v1154
        %v1211 = vpack.c.bf16 %v1157, %v1156
        %v1212 = vpack.c.bf16 %v1159, %v1158
        %v1213 = vpack.c.bf16 %v1161, %v1160
        %v1214 = vpack.c.bf16 %v1163, %v1162
        %v1215 = vpack.c.bf16 %v1165, %v1164
        %v1216 = vpack.c.bf16 %v1167, %v1166
        %v1233 = vunpack.c.l.b16 %v1168
        %v1234 = vunpack.c.l.b16 %v1169
        %v1235 = vunpack.c.l.b16 %v1170
        %v1236 = vunpack.c.l.b16 %v1171
        %v1237 = vunpack.c.l.b16 %v1172
        %v1238 = vunpack.c.l.b16 %v1173
        %v1239 = vunpack.c.l.b16 %v1174
        %v1240 = vunpack.c.l.b16 %v1175
        %v1241 = vunpack.c.l.b16 %v1176
        %v1242 = vunpack.c.l.b16 %v1177
        %v1243 = vunpack.c.l.b16 %v1178
        %v1244 = vunpack.c.l.b16 %v1179
        %v1245 = vunpack.c.l.b16 %v1180
        %v1246 = vunpack.c.l.b16 %v1181
        %v1247 = vunpack.c.l.b16 %v1182
        %v1248 = vunpack.c.l.b16 %v1183
        %v1249 = vpack.c.b16 %v1234, %v1233
        %v1250 = vpack.c.b16 %v1236, %v1235
        %v1251 = vpack.c.b16 %v1238, %v1237
        %v1252 = vpack.c.b16 %v1240, %v1239
        %v1253 = vpack.c.b16 %v1242, %v1241
        %v1254 = vpack.c.b16 %v1244, %v1243
        %v1255 = vpack.c.b16 %v1246, %v1245
        %v1256 = vpack.c.b16 %v1248, %v1247
        %1265 = vmatprep.subr.bf16.mxu0 0
        %1266 = vmatpush1.bf16.msra.mxu0 %v1249
        %1267 = vmatprep.subr.bf16.mxu0 0
        %1268 = vmatpush1.bf16.msra.mxu0 %v1250
        %1269 = vmatprep.subr.bf16.mxu0 0
        %1270 = vmatpush1.bf16.msra.mxu0 %v1251
        %1271 = vmatprep.subr.bf16.mxu0 0
        %1272 = vmatpush1.bf16.msra.mxu0 %v1252
        %1273 = vmatprep.subr.bf16.mxu0 0
        %1274 = vmatpush1.bf16.msra.mxu0 %v1253
        %1275 = vmatprep.subr.bf16.mxu0 0
        %1276 = vmatpush1.bf16.msra.mxu0 %v1254
        %1277 = vmatprep.subr.bf16.mxu0 0
        %1278 = vmatpush1.bf16.msra.mxu0 %v1255
        %1279 = vmatprep.subr.bf16.mxu0 0
        %1280 = vmatpush1.bf16.msra.mxu0 %v1256
        %1281 = vmatprep.subr.bf16.mxu0 0
        %1282 = vmatpush1.bf16.msra.mxu0 0
        %1283 = vmatprep.subr.bf16.mxu0 0
        %1284 = vmatpush1.bf16.msra.mxu0 0
        %1285 = vmatprep.subr.bf16.mxu0 0
        %1286 = vmatpush1.bf16.msra.mxu0 0
        %1287 = vmatprep.subr.bf16.mxu0 0
        %1288 = vmatpush1.bf16.msra.mxu0 0
        %1289 = vmatprep.subr.bf16.mxu0 0
        %1290 = vmatpush1.bf16.msra.mxu0 0
        %1291 = vmatprep.subr.bf16.mxu0 0
        %1292 = vmatpush1.bf16.msra.mxu0 0
        %1293 = vmatprep.subr.bf16.mxu0 0
        %1294 = vmatpush1.bf16.msra.mxu0 0
        %1295 = vmatprep.subr.bf16.mxu0 0
        %1296 = vmatpush1.bf16.msra.mxu0 0
        %1297 = vmatprep.mubr.bf16.mxu0 0
        %1298 = vmatmul.mubr.bf16.gmra.mrb[0].mxu0 %v1201
        %v1299 = vpop.f32.mrb[0].mxu0
        %v1300 = vadd.f32 0.0, %v1299
        %v1301 = vpop.f32.mrb[0].mxu0
        %v1302 = vpop.f32.mrb[0].mxu0
        %v1303 = vadd.f32 0.0, %v1302
        %v1304 = vpop.f32.mrb[0].mxu0
        %1305 = vmatprep.mubr.bf16.mxu0 0
        %1306 = vmatmul.mubr.bf16.gmra.mrb[0].mxu0 %v1202
        %v1307 = vpop.f32.mrb[0].mxu0
        %v1308 = vadd.f32 0.0, %v1307
        %v1309 = vpop.f32.mrb[0].mxu0
        %v1310 = vpop.f32.mrb[0].mxu0
        %v1311 = vadd.f32 0.0, %v1310
        %v1312 = vpop.f32.mrb[0].mxu0
        %1313 = vmatprep.mubr.bf16.mxu0 0
        %1314 = vmatmul.mubr.bf16.gmra.mrb[0].mxu0 %v1203
        %v1315 = vpop.f32.mrb[0].mxu0
        %v1316 = vadd.f32 0.0, %v1315
        %v1317 = vpop.f32.mrb[0].mxu0
        %v1318 = vpop.f32.mrb[0].mxu0
        %v1319 = vadd.f32 0.0, %v1318
        %v1320 = vpop.f32.mrb[0].mxu0
        %1321 = vmatprep.mubr.bf16.mxu0 0
        %1322 = vmatmul.mubr.bf16.gmra.mrb[0].mxu0 %v1204
        %v1323 = vpop.f32.mrb[0].mxu0
        %v1324 = vadd.f32 0.0, %v1323
        %v1325 = vpop.f32.mrb[0].mxu0
        %v1326 = vpop.f32.mrb[0].mxu0
        %v1327 = vadd.f32 0.0, %v1326
        %v1328 = vpop.f32.mrb[0].mxu0
        %1329 = vmatprep.mubr.bf16.mxu0 0
        %1330 = vmatmul.mubr.bf16.gmra.mrb[0].mxu0 %v1205
        %v1331 = vpop.f32.mrb[0].mxu0
        %v1332 = vadd.f32 0.0, %v1331
        %v1333 = vpop.f32.mrb[0].mxu0
        %v1334 = vpop.f32.mrb[0].mxu0
        %v1335 = vadd.f32 0.0, %v1334
        %v1336 = vpop.f32.mrb[0].mxu0
        %1337 = vmatprep.mubr.bf16.mxu0 0
        %1338 = vmatmul.mubr.bf16.gmra.mrb[0].mxu0 %v1206
        %v1339 = vpop.f32.mrb[0].mxu0
        %v1340 = vadd.f32 0.0, %v1339
        %v1341 = vpop.f32.mrb[0].mxu0
        %v1342 = vpop.f32.mrb[0].mxu0
        %v1343 = vadd.f32 0.0, %v1342
        %v1344 = vpop.f32.mrb[0].mxu0
        %1345 = vmatprep.mubr.bf16.mxu0 0
        %1346 = vmatmul.mubr.bf16.gmra.mrb[0].mxu0 %v1207
        %v1347 = vpop.f32.mrb[0].mxu0
        %v1348 = vadd.f32 0.0, %v1347
        %v1349 = vpop.f32.mrb[0].mxu0
        %v1350 = vpop.f32.mrb[0].mxu0
        %v1351 = vadd.f32 0.0, %v1350
        %v1352 = vpop.f32.mrb[0].mxu0
        %1353 = vmatprep.mubr.bf16.mxu0 0
        %1354 = vmatmul.mubr.bf16.gmra.mrb[0].mxu0 %v1208
        %v1355 = vpop.f32.mrb[0].mxu0
        %v1356 = vadd.f32 0.0, %v1355
        %v1357 = vpop.f32.mrb[0].mxu0
        %v1358 = vpop.f32.mrb[0].mxu0
        %v1359 = vadd.f32 0.0, %v1358
        %v1360 = vpop.f32.mrb[0].mxu0
        %1361 = vmatprep.mubr.bf16.mxu0 0
        %1362 = vmatmul.mubr.bf16.gmra.mrb[0].mxu0 %v1209
        %v1363 = vpop.f32.mrb[0].mxu0
        %v1364 = vadd.f32 0.0, %v1363
        %v1365 = vpop.f32.mrb[0].mxu0
        %v1366 = vpop.f32.mrb[0].mxu0
        %v1367 = vadd.f32 0.0, %v1366
        %v1368 = vpop.f32.mrb[0].mxu0
        %1369 = vmatprep.mubr.bf16.mxu0 0
        %1370 = vmatmul.mubr.bf16.gmra.mrb[0].mxu0 %v1210
        %v1371 = vpop.f32.mrb[0].mxu0
        %v1372 = vadd.f32 0.0, %v1371
        %v1373 = vpop.f32.mrb[0].mxu0
        %v1374 = vpop.f32.mrb[0].mxu0
        %v1375 = vadd.f32 0.0, %v1374
        %v1376 = vpop.f32.mrb[0].mxu0
        %1377 = vmatprep.mubr.bf16.mxu0 0
        %1378 = vmatmul.mubr.bf16.gmra.mrb[0].mxu0 %v1211
        %v1379 = vpop.f32.mrb[0].mxu0
        %v1380 = vadd.f32 0.0, %v1379
        %v1381 = vpop.f32.mrb[0].mxu0
        %v1382 = vpop.f32.mrb[0].mxu0
        %v1383 = vadd.f32 0.0, %v1382
        %v1384 = vpop.f32.mrb[0].mxu0
        %1385 = vmatprep.mubr.bf16.mxu0 0
        %1386 = vmatmul.mubr.bf16.gmra.mrb[0].mxu0 %v1212
        %v1387 = vpop.f32.mrb[0].mxu0
        %v1388 = vadd.f32 0.0, %v1387
        %v1389 = vpop.f32.mrb[0].mxu0
        %v1390 = vpop.f32.mrb[0].mxu0
        %v1391 = vadd.f32 0.0, %v1390
        %v1392 = vpop.f32.mrb[0].mxu0
        %1393 = vmatprep.mubr.bf16.mxu0 0
        %1394 = vmatmul.mubr.bf16.gmra.mrb[0].mxu0 %v1213
        %v1395 = vpop.f32.mrb[0].mxu0
        %v1396 = vadd.f32 0.0, %v1395
        %v1397 = vpop.f32.mrb[0].mxu0
        %v1398 = vpop.f32.mrb[0].mxu0
        %v1399 = vadd.f32 0.0, %v1398
        %v1400 = vpop.f32.mrb[0].mxu0
        %1401 = vmatprep.mubr.bf16.mxu0 0
        %1402 = vmatmul.mubr.bf16.gmra.mrb[0].mxu0 %v1214
        %v1403 = vpop.f32.mrb[0].mxu0
        %v1404 = vadd.f32 0.0, %v1403
        %v1405 = vpop.f32.mrb[0].mxu0
        %v1406 = vpop.f32.mrb[0].mxu0
        %v1407 = vadd.f32 0.0, %v1406
        %v1408 = vpop.f32.mrb[0].mxu0
        %1409 = vmatprep.mubr.bf16.mxu0 0
        %1410 = vmatmul.mubr.bf16.gmra.mrb[0].mxu0 %v1215
        %v1411 = vpop.f32.mrb[0].mxu0
        %v1412 = vadd.f32 0.0, %v1411
        %v1413 = vpop.f32.mrb[0].mxu0
        %v1414 = vpop.f32.mrb[0].mxu0
        %v1415 = vadd.f32 0.0, %v1414
        %v1416 = vpop.f32.mrb[0].mxu0
        %1417 = vmatprep.mubr.bf16.mxu0 0
        %1418 = vmatmul.mubr.bf16.gmra.mrb[0].mxu0 %v1216
        %v1419 = vpop.f32.mrb[0].mxu0
        %v1420 = vadd.f32 0.0, %v1419
        %v1421 = vpop.f32.mrb[0].mxu0
        %v1422 = vpop.f32.mrb[0].mxu0
        %v1423 = vadd.f32 0.0, %v1422
        %v1424 = vpop.f32.mrb[0].mxu0
        %1425 = vdwg.mxu0
        %v1426 = vmul.f32 %v1300, 0.8333333
        %v1427 = vmul.f32 %v1303, 0.8333333
        %v1428 = vmul.f32 %v1308, 0.8333333
        %v1429 = vmul.f32 %v1311, 0.8333333
        %v1430 = vmul.f32 %v1316, 0.8333333
        %v1431 = vmul.f32 %v1319, 0.8333333
        %v1432 = vmul.f32 %v1324, 0.8333333
        %v1433 = vmul.f32 %v1327, 0.8333333
        %v1434 = vmul.f32 %v1332, 0.8333333
        %v1435 = vmul.f32 %v1335, 0.8333333
        %v1436 = vmul.f32 %v1340, 0.8333333
        %v1437 = vmul.f32 %v1343, 0.8333333
        %v1438 = vmul.f32 %v1348, 0.8333333
        %v1439 = vmul.f32 %v1351, 0.8333333
        %v1440 = vmul.f32 %v1356, 0.8333333
        %v1441 = vmul.f32 %v1359, 0.8333333
        %v1442 = vmul.f32 %v1364, 0.8333333
        %v1443 = vmul.f32 %v1367, 0.8333333
        %v1444 = vmul.f32 %v1372, 0.8333333
        %v1445 = vmul.f32 %v1375, 0.8333333
        %v1446 = vmul.f32 %v1380, 0.8333333
        %v1447 = vmul.f32 %v1383, 0.8333333
        %v1448 = vmul.f32 %v1388, 0.8333333
        %v1449 = vmul.f32 %v1391, 0.8333333
        %v1450 = vmul.f32 %v1396, 0.8333333
        %v1451 = vmul.f32 %v1399, 0.8333333
        %v1452 = vmul.f32 %v1404, 0.8333333
        %v1453 = vmul.f32 %v1407, 0.8333333
        %v1454 = vmul.f32 %v1412, 0.8333333
        %v1455 = vmul.f32 %v1415, 0.8333333
        %v1456 = vmul.f32 %v1420, 0.8333333
        %v1457 = vmul.f32 %v1423, 0.8333333
        %v1458 = vmul.f32 %v1300, 0.5
        %v1459 = vmul.f32 %v1303, 0.5
        %v1460 = vmul.f32 %v1308, 0.5
        %v1461 = vmul.f32 %v1311, 0.5
        %v1462 = vmul.f32 %v1316, 0.5
        %v1463 = vmul.f32 %v1319, 0.5
        %v1464 = vmul.f32 %v1324, 0.5
        %v1465 = vmul.f32 %v1327, 0.5
        %v1466 = vmul.f32 %v1332, 0.5
        %v1467 = vmul.f32 %v1335, 0.5
        %v1468 = vmul.f32 %v1340, 0.5
        %v1469 = vmul.f32 %v1343, 0.5
        %v1470 = vmul.f32 %v1348, 0.5
        %v1471 = vmul.f32 %v1351, 0.5
        %v1472 = vmul.f32 %v1356, 0.5
        %v1473 = vmul.f32 %v1359, 0.5
        %v1474 = vmul.f32 %v1364, 0.5
        %v1475 = vmul.f32 %v1367, 0.5
        %v1476 = vmul.f32 %v1372, 0.5
        %v1477 = vmul.f32 %v1375, 0.5
        %v1478 = vmul.f32 %v1380, 0.5
        %v1479 = vmul.f32 %v1383, 0.5
        %v1480 = vmul.f32 %v1388, 0.5
        %v1481 = vmul.f32 %v1391, 0.5
        %v1482 = vmul.f32 %v1396, 0.5
        %v1483 = vmul.f32 %v1399, 0.5
        %v1484 = vmul.f32 %v1404, 0.5
        %v1485 = vmul.f32 %v1407, 0.5
        %v1486 = vmul.f32 %v1412, 0.5
        %v1487 = vmul.f32 %v1415, 0.5
        %v1488 = vmul.f32 %v1420, 0.5
        %v1489 = vmul.f32 %v1423, 0.5
        %v1490 = vtanh.pop %v1458
        %v1491 = vtanh.pop %v1459
        %v1492 = vtanh.pop %v1460
        %v1493 = vtanh.pop %v1461
        %v1494 = vtanh.pop %v1462
        %v1495 = vtanh.pop %v1463
        %v1496 = vtanh.pop %v1464
        %v1497 = vtanh.pop %v1465
        %v1498 = vtanh.pop %v1466
        %v1499 = vtanh.pop %v1467
        %v1500 = vtanh.pop %v1468
        %v1501 = vtanh.pop %v1469
        %v1502 = vtanh.pop %v1470
        %v1503 = vtanh.pop %v1471
        %v1504 = vtanh.pop %v1472
        %v1505 = vtanh.pop %v1473
        %v1506 = vtanh.pop %v1474
        %v1507 = vtanh.pop %v1475
        %v1508 = vtanh.pop %v1476
        %v1509 = vtanh.pop %v1477
        %v1510 = vtanh.pop %v1478
        %v1511 = vtanh.pop %v1479
        %v1512 = vtanh.pop %v1480
        %v1513 = vtanh.pop %v1481
        %v1514 = vtanh.pop %v1482
        %v1515 = vtanh.pop %v1483
        %v1516 = vtanh.pop %v1484
        %v1517 = vtanh.pop %v1485
        %v1518 = vtanh.pop %v1486
        %v1519 = vtanh.pop %v1487
        %v1520 = vtanh.pop %v1488
        %v1521 = vtanh.pop %v1489
        %v1522 = vadd.f32 %v1490, 1.0
        %v1523 = vadd.f32 %v1491, 1.0
        %v1524 = vadd.f32 %v1492, 1.0
        %v1525 = vadd.f32 %v1493, 1.0
        %v1526 = vadd.f32 %v1494, 1.0
        %v1527 = vadd.f32 %v1495, 1.0
        %v1528 = vadd.f32 %v1496, 1.0
        %v1529 = vadd.f32 %v1497, 1.0
        %v1530 = vadd.f32 %v1498, 1.0
        %v1531 = vadd.f32 %v1499, 1.0
        %v1532 = vadd.f32 %v1500, 1.0
        %v1533 = vadd.f32 %v1501, 1.0
        %v1534 = vadd.f32 %v1502, 1.0
        %v1535 = vadd.f32 %v1503, 1.0
        %v1536 = vadd.f32 %v1504, 1.0
        %v1537 = vadd.f32 %v1505, 1.0
        %v1538 = vadd.f32 %v1506, 1.0
        %v1539 = vadd.f32 %v1507, 1.0
        %v1540 = vadd.f32 %v1508, 1.0
        %v1541 = vadd.f32 %v1509, 1.0
        %v1542 = vadd.f32 %v1510, 1.0
        %v1543 = vadd.f32 %v1511, 1.0
        %v1544 = vadd.f32 %v1512, 1.0
        %v1545 = vadd.f32 %v1513, 1.0
        %v1546 = vadd.f32 %v1514, 1.0
        %v1547 = vadd.f32 %v1515, 1.0
        %v1548 = vadd.f32 %v1516, 1.0
        %v1549 = vadd.f32 %v1517, 1.0
        %v1550 = vadd.f32 %v1518, 1.0
        %v1551 = vadd.f32 %v1519, 1.0
        %v1552 = vadd.f32 %v1520, 1.0
        %v1553 = vadd.f32 %v1521, 1.0
        %v1554 = vmul.f32 %v1426, %v1522
        %v1555 = vmul.f32 %v1427, %v1523
        %v1556 = vmul.f32 %v1428, %v1524
        %v1557 = vmul.f32 %v1429, %v1525
        %v1558 = vmul.f32 %v1430, %v1526
        %v1559 = vmul.f32 %v1431, %v1527
        %v1560 = vmul.f32 %v1432, %v1528
        %v1561 = vmul.f32 %v1433, %v1529
        %v1562 = vmul.f32 %v1434, %v1530
        %v1563 = vmul.f32 %v1435, %v1531
        %v1564 = vmul.f32 %v1436, %v1532
        %v1565 = vmul.f32 %v1437, %v1533
        %v1566 = vmul.f32 %v1438, %v1534
        %v1567 = vmul.f32 %v1439, %v1535
        %v1568 = vmul.f32 %v1440, %v1536
        %v1569 = vmul.f32 %v1441, %v1537
        %v1570 = vmul.f32 %v1442, %v1538
        %v1571 = vmul.f32 %v1443, %v1539
        %v1572 = vmul.f32 %v1444, %v1540
        %v1573 = vmul.f32 %v1445, %v1541
        %v1574 = vmul.f32 %v1446, %v1542
        %v1575 = vmul.f32 %v1447, %v1543
        %v1576 = vmul.f32 %v1448, %v1544
        %v1577 = vmul.f32 %v1449, %v1545
        %v1578 = vmul.f32 %v1450, %v1546
        %v1579 = vmul.f32 %v1451, %v1547
        %v1580 = vmul.f32 %v1452, %v1548
        %v1581 = vmul.f32 %v1453, %v1549
        %v1582 = vmul.f32 %v1454, %v1550
        %v1583 = vmul.f32 %v1455, %v1551
        %v1584 = vmul.f32 %v1456, %v1552
        %v1585 = vmul.f32 %v1457, %v1553
        %v1586 = vpack.c.bf16 %v1555, %v1554
        %v1587 = vpack.c.bf16 %v1557, %v1556
        %v1588 = vpack.c.bf16 %v1559, %v1558
        %v1589 = vpack.c.bf16 %v1561, %v1560
        %v1590 = vpack.c.bf16 %v1563, %v1562
        %v1591 = vpack.c.bf16 %v1565, %v1564
        %v1592 = vpack.c.bf16 %v1567, %v1566
        %v1593 = vpack.c.bf16 %v1569, %v1568
        %v1594 = vpack.c.bf16 %v1571, %v1570
        %v1595 = vpack.c.bf16 %v1573, %v1572
        %v1596 = vpack.c.bf16 %v1575, %v1574
        %v1597 = vpack.c.bf16 %v1577, %v1576
        %v1598 = vpack.c.bf16 %v1579, %v1578
        %v1599 = vpack.c.bf16 %v1581, %v1580
        %v1600 = vpack.c.bf16 %v1583, %v1582
        %v1601 = vpack.c.bf16 %v1585, %v1584
        %v1618 = vunpack.c.l.b16 %v1185
        %v1619 = vunpack.c.l.b16 %v1186
        %v1620 = vunpack.c.l.b16 %v1187
        %v1621 = vunpack.c.l.b16 %v1188
        %v1622 = vunpack.c.l.b16 %v1189
        %v1623 = vunpack.c.l.b16 %v1190
        %v1624 = vunpack.c.l.b16 %v1191
        %v1625 = vunpack.c.l.b16 %v1192
        %v1626 = vunpack.c.l.b16 %v1193
        %v1627 = vunpack.c.l.b16 %v1194
        %v1628 = vunpack.c.l.b16 %v1195
        %v1629 = vunpack.c.l.b16 %v1196
        %v1630 = vunpack.c.l.b16 %v1197
        %v1631 = vunpack.c.l.b16 %v1198
        %v1632 = vunpack.c.l.b16 %v1199
        %v1633 = vunpack.c.l.b16 %v1200
        %v1634 = vpack.c.b16 %v1619, %v1618
        %v1635 = vpack.c.b16 %v1621, %v1620
        %v1636 = vpack.c.b16 %v1623, %v1622
        %v1637 = vpack.c.b16 %v1625, %v1624
        %v1638 = vpack.c.b16 %v1627, %v1626
        %v1639 = vpack.c.b16 %v1629, %v1628
        %v1640 = vpack.c.b16 %v1631, %v1630
        %v1641 = vpack.c.b16 %v1633, %v1632
        %1650 = vmatprep.subr.bf16.mxu0 0
        %1651 = vmatpush1.bf16.msra.mxu0 %v1634
        %1652 = vmatprep.subr.bf16.mxu0 0
        %1653 = vmatpush1.bf16.msra.mxu0 %v1635
        %1654 = vmatprep.subr.bf16.mxu0 0
        %1655 = vmatpush1.bf16.msra.mxu0 %v1636
        %1656 = vmatprep.subr.bf16.mxu0 0
        %1657 = vmatpush1.bf16.msra.mxu0 %v1637
        %1658 = vmatprep.subr.bf16.mxu0 0
        %1659 = vmatpush1.bf16.msra.mxu0 %v1638
        %1660 = vmatprep.subr.bf16.mxu0 0
        %1661 = vmatpush1.bf16.msra.mxu0 %v1639
        %1662 = vmatprep.subr.bf16.mxu0 0
        %1663 = vmatpush1.bf16.msra.mxu0 %v1640
        %1664 = vmatprep.subr.bf16.mxu0 0
        %1665 = vmatpush1.bf16.msra.mxu0 %v1641
        %1666 = vmatprep.subr.bf16.mxu0 0
        %1667 = vmatpush1.bf16.msra.mxu0 0
        %1668 = vmatprep.subr.bf16.mxu0 0
        %1669 = vmatpush1.bf16.msra.mxu0 0
        %1670 = vmatprep.subr.bf16.mxu0 0
        %1671 = vmatpush1.bf16.msra.mxu0 0
        %1672 = vmatprep.subr.bf16.mxu0 0
        %1673 = vmatpush1.bf16.msra.mxu0 0
        %1674 = vmatprep.subr.bf16.mxu0 0
        %1675 = vmatpush1.bf16.msra.mxu0 0
        %1676 = vmatprep.subr.bf16.mxu0 0
        %1677 = vmatpush1.bf16.msra.mxu0 0
        %1678 = vmatprep.subr.bf16.mxu0 0
        %1679 = vmatpush1.bf16.msra.mxu0 0
        %1680 = vmatprep.subr.bf16.mxu0 0
        %1681 = vmatpush1.bf16.msra.mxu0 0
        %1682 = vmatprep.mubr.bf16.mxu0 0
        %1683 = vmatmul.mubr.bf16.gmra.mrb[0].mxu0 %v1586
        %v1684 = vpop.f32.mrb[0].mxu0
        %v1685 = vadd.f32 0.0, %v1684
        %v1686 = vpop.f32.mrb[0].mxu0
        %v1687 = vpop.f32.mrb[0].mxu0
        %v1688 = vadd.f32 0.0, %v1687
        %v1689 = vpop.f32.mrb[0].mxu0
        %1690 = vmatprep.mubr.bf16.mxu0 0
        %1691 = vmatmul.mubr.bf16.gmra.mrb[0].mxu0 %v1587
        %v1692 = vpop.f32.mrb[0].mxu0
        %v1693 = vadd.f32 0.0, %v1692
        %v1694 = vpop.f32.mrb[0].mxu0
        %v1695 = vpop.f32.mrb[0].mxu0
        %v1696 = vadd.f32 0.0, %v1695
        %v1697 = vpop.f32.mrb[0].mxu0
        %1698 = vmatprep.mubr.bf16.mxu0 0
        %1699 = vmatmul.mubr.bf16.gmra.mrb[0].mxu0 %v1588
        %v1700 = vpop.f32.mrb[0].mxu0
        %v1701 = vadd.f32 0.0, %v1700
        %v1702 = vpop.f32.mrb[0].mxu0
        %v1703 = vpop.f32.mrb[0].mxu0
        %v1704 = vadd.f32 0.0, %v1703
        %v1705 = vpop.f32.mrb[0].mxu0
        %1706 = vmatprep.mubr.bf16.mxu0 0
        %1707 = vmatmul.mubr.bf16.gmra.mrb[0].mxu0 %v1589
        %v1708 = vpop.f32.mrb[0].mxu0
        %v1709 = vadd.f32 0.0, %v1708
        %v1710 = vpop.f32.mrb[0].mxu0
        %v1711 = vpop.f32.mrb[0].mxu0
        %v1712 = vadd.f32 0.0, %v1711
        %v1713 = vpop.f32.mrb[0].mxu0
        %1714 = vmatprep.mubr.bf16.mxu0 0
        %1715 = vmatmul.mubr.bf16.gmra.mrb[0].mxu0 %v1590
        %v1716 = vpop.f32.mrb[0].mxu0
        %v1717 = vadd.f32 0.0, %v1716
        %v1718 = vpop.f32.mrb[0].mxu0
        %v1719 = vpop.f32.mrb[0].mxu0
        %v1720 = vadd.f32 0.0, %v1719
        %v1721 = vpop.f32.mrb[0].mxu0
        %1722 = vmatprep.mubr.bf16.mxu0 0
        %1723 = vmatmul.mubr.bf16.gmra.mrb[0].mxu0 %v1591
        %v1724 = vpop.f32.mrb[0].mxu0
        %v1725 = vadd.f32 0.0, %v1724
        %v1726 = vpop.f32.mrb[0].mxu0
        %v1727 = vpop.f32.mrb[0].mxu0
        %v1728 = vadd.f32 0.0, %v1727
        %v1729 = vpop.f32.mrb[0].mxu0
        %1730 = vmatprep.mubr.bf16.mxu0 0
        %1731 = vmatmul.mubr.bf16.gmra.mrb[0].mxu0 %v1592
        %v1732 = vpop.f32.mrb[0].mxu0
        %v1733 = vadd.f32 0.0, %v1732
        %v1734 = vpop.f32.mrb[0].mxu0
        %v1735 = vpop.f32.mrb[0].mxu0
        %v1736 = vadd.f32 0.0, %v1735
        %v1737 = vpop.f32.mrb[0].mxu0
        %1738 = vmatprep.mubr.bf16.mxu0 0
        %1739 = vmatmul.mubr.bf16.gmra.mrb[0].mxu0 %v1593
        %v1740 = vpop.f32.mrb[0].mxu0
        %v1741 = vadd.f32 0.0, %v1740
        %v1742 = vpop.f32.mrb[0].mxu0
        %v1743 = vpop.f32.mrb[0].mxu0
        %v1744 = vadd.f32 0.0, %v1743
        %v1745 = vpop.f32.mrb[0].mxu0
        %1746 = vmatprep.mubr.bf16.mxu0 0
        %1747 = vmatmul.mubr.bf16.gmra.mrb[0].mxu0 %v1594
        %v1748 = vpop.f32.mrb[0].mxu0
        %v1749 = vadd.f32 0.0, %v1748
        %v1750 = vpop.f32.mrb[0].mxu0
        %v1751 = vpop.f32.mrb[0].mxu0
        %v1752 = vadd.f32 0.0, %v1751
        %v1753 = vpop.f32.mrb[0].mxu0
        %1754 = vmatprep.mubr.bf16.mxu0 0
        %1755 = vmatmul.mubr.bf16.gmra.mrb[0].mxu0 %v1595
        %v1756 = vpop.f32.mrb[0].mxu0
        %v1757 = vadd.f32 0.0, %v1756
        %v1758 = vpop.f32.mrb[0].mxu0
        %v1759 = vpop.f32.mrb[0].mxu0
        %v1760 = vadd.f32 0.0, %v1759
        %v1761 = vpop.f32.mrb[0].mxu0
        %1762 = vmatprep.mubr.bf16.mxu0 0
        %1763 = vmatmul.mubr.bf16.gmra.mrb[0].mxu0 %v1596
        %v1764 = vpop.f32.mrb[0].mxu0
        %v1765 = vadd.f32 0.0, %v1764
        %v1766 = vpop.f32.mrb[0].mxu0
        %v1767 = vpop.f32.mrb[0].mxu0
        %v1768 = vadd.f32 0.0, %v1767
        %v1769 = vpop.f32.mrb[0].mxu0
        %1770 = vmatprep.mubr.bf16.mxu0 0
        %1771 = vmatmul.mubr.bf16.gmra.mrb[0].mxu0 %v1597
        %v1772 = vpop.f32.mrb[0].mxu0
        %v1773 = vadd.f32 0.0, %v1772
        %v1774 = vpop.f32.mrb[0].mxu0
        %v1775 = vpop.f32.mrb[0].mxu0
        %v1776 = vadd.f32 0.0, %v1775
        %v1777 = vpop.f32.mrb[0].mxu0
        %1778 = vmatprep.mubr.bf16.mxu0 0
        %1779 = vmatmul.mubr.bf16.gmra.mrb[0].mxu0 %v1598
        %v1780 = vpop.f32.mrb[0].mxu0
        %v1781 = vadd.f32 0.0, %v1780
        %v1782 = vpop.f32.mrb[0].mxu0
        %v1783 = vpop.f32.mrb[0].mxu0
        %v1784 = vadd.f32 0.0, %v1783
        %v1785 = vpop.f32.mrb[0].mxu0
        %1786 = vmatprep.mubr.bf16.mxu0 0
        %1787 = vmatmul.mubr.bf16.gmra.mrb[0].mxu0 %v1599
        %v1788 = vpop.f32.mrb[0].mxu0
        %v1789 = vadd.f32 0.0, %v1788
        %v1790 = vpop.f32.mrb[0].mxu0
        %v1791 = vpop.f32.mrb[0].mxu0
        %v1792 = vadd.f32 0.0, %v1791
        %v1793 = vpop.f32.mrb[0].mxu0
        %1794 = vmatprep.mubr.bf16.mxu0 0
        %1795 = vmatmul.mubr.bf16.gmra.mrb[0].mxu0 %v1600
        %v1796 = vpop.f32.mrb[0].mxu0
        %v1797 = vadd.f32 0.0, %v1796
        %v1798 = vpop.f32.mrb[0].mxu0
        %v1799 = vpop.f32.mrb[0].mxu0
        %v1800 = vadd.f32 0.0, %v1799
        %v1801 = vpop.f32.mrb[0].mxu0
        %1802 = vmatprep.mubr.bf16.mxu0 0
        %1803 = vmatmul.mubr.bf16.gmra.mrb[0].mxu0 %v1601
        %v1804 = vpop.f32.mrb[0].mxu0
        %v1805 = vadd.f32 0.0, %v1804
        %v1806 = vpop.f32.mrb[0].mxu0
        %v1807 = vpop.f32.mrb[0].mxu0
        %v1808 = vadd.f32 0.0, %v1807
        %v1809 = vpop.f32.mrb[0].mxu0
        %1810 = vdwg.mxu0
        %v1811 = vmul.f32 %v1685, 0.8333333
        %v1812 = vmul.f32 %v1688, 0.8333333
        %v1813 = vmul.f32 %v1693, 0.8333333
        %v1814 = vmul.f32 %v1696, 0.8333333
        %v1815 = vmul.f32 %v1701, 0.8333333
        %v1816 = vmul.f32 %v1704, 0.8333333
        %v1817 = vmul.f32 %v1709, 0.8333333
        %v1818 = vmul.f32 %v1712, 0.8333333
        %v1819 = vmul.f32 %v1717, 0.8333333
        %v1820 = vmul.f32 %v1720, 0.8333333
        %v1821 = vmul.f32 %v1725, 0.8333333
        %v1822 = vmul.f32 %v1728, 0.8333333
        %v1823 = vmul.f32 %v1733, 0.8333333
        %v1824 = vmul.f32 %v1736, 0.8333333
        %v1825 = vmul.f32 %v1741, 0.8333333
        %v1826 = vmul.f32 %v1744, 0.8333333
        %v1827 = vmul.f32 %v1749, 0.8333333
        %v1828 = vmul.f32 %v1752, 0.8333333
        %v1829 = vmul.f32 %v1757, 0.8333333
        %v1830 = vmul.f32 %v1760, 0.8333333
        %v1831 = vmul.f32 %v1765, 0.8333333
        %v1832 = vmul.f32 %v1768, 0.8333333
        %v1833 = vmul.f32 %v1773, 0.8333333
        %v1834 = vmul.f32 %v1776, 0.8333333
        %v1835 = vmul.f32 %v1781, 0.8333333
        %v1836 = vmul.f32 %v1784, 0.8333333
        %v1837 = vmul.f32 %v1789, 0.8333333
        %v1838 = vmul.f32 %v1792, 0.8333333
        %v1839 = vmul.f32 %v1797, 0.8333333
        %v1840 = vmul.f32 %v1800, 0.8333333
        %v1841 = vmul.f32 %v1805, 0.8333333
        %v1842 = vmul.f32 %v1808, 0.8333333
        %v1843 = vmul.f32 %v1685, 0.5
        %v1844 = vmul.f32 %v1688, 0.5
        %v1845 = vmul.f32 %v1693, 0.5
        %v1846 = vmul.f32 %v1696, 0.5
        %v1847 = vmul.f32 %v1701, 0.5
        %v1848 = vmul.f32 %v1704, 0.5
        %v1849 = vmul.f32 %v1709, 0.5
        %v1850 = vmul.f32 %v1712, 0.5
        %v1851 = vmul.f32 %v1717, 0.5
        %v1852 = vmul.f32 %v1720, 0.5
        %v1853 = vmul.f32 %v1725, 0.5
        %v1854 = vmul.f32 %v1728, 0.5
        %v1855 = vmul.f32 %v1733, 0.5
        %v1856 = vmul.f32 %v1736, 0.5
        %v1857 = vmul.f32 %v1741, 0.5
        %v1858 = vmul.f32 %v1744, 0.5
        %v1859 = vmul.f32 %v1749, 0.5
        %v1860 = vmul.f32 %v1752, 0.5
        %v1861 = vmul.f32 %v1757, 0.5
        %v1862 = vmul.f32 %v1760, 0.5
        %v1863 = vmul.f32 %v1765, 0.5
        %v1864 = vmul.f32 %v1768, 0.5
        %v1865 = vmul.f32 %v1773, 0.5
        %v1866 = vmul.f32 %v1776, 0.5
        %v1867 = vmul.f32 %v1781, 0.5
        %v1868 = vmul.f32 %v1784, 0.5
        %v1869 = vmul.f32 %v1789, 0.5
        %v1870 = vmul.f32 %v1792, 0.5
        %v1871 = vmul.f32 %v1797, 0.5
        %v1872 = vmul.f32 %v1800, 0.5
        %v1873 = vmul.f32 %v1805, 0.5
        %v1874 = vmul.f32 %v1808, 0.5
        %v1875 = vtanh.pop %v1843
        %v1876 = vtanh.pop %v1844
        %v1877 = vtanh.pop %v1845
        %v1878 = vtanh.pop %v1846
        %v1879 = vtanh.pop %v1847
        %v1880 = vtanh.pop %v1848
        %v1881 = vtanh.pop %v1849
        %v1882 = vtanh.pop %v1850
        %v1883 = vtanh.pop %v1851
        %v1884 = vtanh.pop %v1852
        %v1885 = vtanh.pop %v1853
        %v1886 = vtanh.pop %v1854
        %v1887 = vtanh.pop %v1855
        %v1888 = vtanh.pop %v1856
        %v1889 = vtanh.pop %v1857
        %v1890 = vtanh.pop %v1858
        %v1891 = vtanh.pop %v1859
        %v1892 = vtanh.pop %v1860
        %v1893 = vtanh.pop %v1861
        %v1894 = vtanh.pop %v1862
        %v1895 = vtanh.pop %v1863
        %v1896 = vtanh.pop %v1864
        %v1897 = vtanh.pop %v1865
        %v1898 = vtanh.pop %v1866
        %v1899 = vtanh.pop %v1867
        %v1900 = vtanh.pop %v1868
        %v1901 = vtanh.pop %v1869
        %v1902 = vtanh.pop %v1870
        %v1903 = vtanh.pop %v1871
        %v1904 = vtanh.pop %v1872
        %v1905 = vtanh.pop %v1873
        %v1906 = vtanh.pop %v1874
        %v1907 = vadd.f32 %v1875, 1.0
        %v1908 = vadd.f32 %v1876, 1.0
        %v1909 = vadd.f32 %v1877, 1.0
        %v1910 = vadd.f32 %v1878, 1.0
        %v1911 = vadd.f32 %v1879, 1.0
        %v1912 = vadd.f32 %v1880, 1.0
        %v1913 = vadd.f32 %v1881, 1.0
        %v1914 = vadd.f32 %v1882, 1.0
        %v1915 = vadd.f32 %v1883, 1.0
        %v1916 = vadd.f32 %v1884, 1.0
        %v1917 = vadd.f32 %v1885, 1.0
        %v1918 = vadd.f32 %v1886, 1.0
        %v1919 = vadd.f32 %v1887, 1.0
        %v1920 = vadd.f32 %v1888, 1.0
        %v1921 = vadd.f32 %v1889, 1.0
        %v1922 = vadd.f32 %v1890, 1.0
        %v1923 = vadd.f32 %v1891, 1.0
        %v1924 = vadd.f32 %v1892, 1.0
        %v1925 = vadd.f32 %v1893, 1.0
        %v1926 = vadd.f32 %v1894, 1.0
        %v1927 = vadd.f32 %v1895, 1.0
        %v1928 = vadd.f32 %v1896, 1.0
        %v1929 = vadd.f32 %v1897, 1.0
        %v1930 = vadd.f32 %v1898, 1.0
        %v1931 = vadd.f32 %v1899, 1.0
        %v1932 = vadd.f32 %v1900, 1.0
        %v1933 = vadd.f32 %v1901, 1.0
        %v1934 = vadd.f32 %v1902, 1.0
        %v1935 = vadd.f32 %v1903, 1.0
        %v1936 = vadd.f32 %v1904, 1.0
        %v1937 = vadd.f32 %v1905, 1.0
        %v1938 = vadd.f32 %v1906, 1.0
        %v1939 = vmul.f32 %v1811, %v1907
        %v1940 = vmul.f32 %v1812, %v1908
        %v1941 = vmul.f32 %v1813, %v1909
        %v1942 = vmul.f32 %v1814, %v1910
        %v1943 = vmul.f32 %v1815, %v1911
        %v1944 = vmul.f32 %v1816, %v1912
        %v1945 = vmul.f32 %v1817, %v1913
        %v1946 = vmul.f32 %v1818, %v1914
        %v1947 = vmul.f32 %v1819, %v1915
        %v1948 = vmul.f32 %v1820, %v1916
        %v1949 = vmul.f32 %v1821, %v1917
        %v1950 = vmul.f32 %v1822, %v1918
        %v1951 = vmul.f32 %v1823, %v1919
        %v1952 = vmul.f32 %v1824, %v1920
        %v1953 = vmul.f32 %v1825, %v1921
        %v1954 = vmul.f32 %v1826, %v1922
        %v1955 = vmul.f32 %v1827, %v1923
        %v1956 = vmul.f32 %v1828, %v1924
        %v1957 = vmul.f32 %v1829, %v1925
        %v1958 = vmul.f32 %v1830, %v1926
        %v1959 = vmul.f32 %v1831, %v1927
        %v1960 = vmul.f32 %v1832, %v1928
        %v1961 = vmul.f32 %v1833, %v1929
        %v1962 = vmul.f32 %v1834, %v1930
        %v1963 = vmul.f32 %v1835, %v1931
        %v1964 = vmul.f32 %v1836, %v1932
        %v1965 = vmul.f32 %v1837, %v1933
        %v1966 = vmul.f32 %v1838, %v1934
        %v1967 = vmul.f32 %v1839, %v1935
        %v1968 = vmul.f32 %v1840, %v1936
        %v1969 = vmul.f32 %v1841, %v1937
        %v1970 = vmul.f32 %v1842, %v1938
        %v1971 = vadd.f32 %v1136, %v1939
        %v1972 = vadd.f32 %v1137, %v1940
        %v1973 = vadd.f32 %v1138, %v1941
        %v1974 = vadd.f32 %v1139, %v1942
        %v1975 = vadd.f32 %v1140, %v1943
        %v1976 = vadd.f32 %v1141, %v1944
        %v1977 = vadd.f32 %v1142, %v1945
        %v1978 = vadd.f32 %v1143, %v1946
        %v1979 = vadd.f32 %v1144, %v1947
        %v1980 = vadd.f32 %v1145, %v1948
        %v1981 = vadd.f32 %v1146, %v1949
        %v1982 = vadd.f32 %v1147, %v1950
        %v1983 = vadd.f32 %v1148, %v1951
        %v1984 = vadd.f32 %v1149, %v1952
        %v1985 = vadd.f32 %v1150, %v1953
        %v1986 = vadd.f32 %v1151, %v1954
        %v1987 = vadd.f32 %v1152, %v1955
        %v1988 = vadd.f32 %v1153, %v1956
        %v1989 = vadd.f32 %v1154, %v1957
        %v1990 = vadd.f32 %v1155, %v1958
        %v1991 = vadd.f32 %v1156, %v1959
        %v1992 = vadd.f32 %v1157, %v1960
        %v1993 = vadd.f32 %v1158, %v1961
        %v1994 = vadd.f32 %v1159, %v1962
        %v1995 = vadd.f32 %v1160, %v1963
        %v1996 = vadd.f32 %v1161, %v1964
        %v1997 = vadd.f32 %v1162, %v1965
        %v1998 = vadd.f32 %v1163, %v1966
        %v1999 = vadd.f32 %v1164, %v1967
        %v2000 = vadd.f32 %v1165, %v1968
        %v2001 = vadd.f32 %v1166, %v1969
        %v2002 = vadd.f32 %v1167, %v1970
        %v2003 = vmul.f32 %v1971, 0.70710677
        %v2004 = vmul.f32 %v1972, 0.70710677
        %v2005 = vmul.f32 %v1973, 0.70710677
        %v2006 = vmul.f32 %v1974, 0.70710677
        %v2007 = vmul.f32 %v1975, 0.70710677
        %v2008 = vmul.f32 %v1976, 0.70710677
        %v2009 = vmul.f32 %v1977, 0.70710677
        %v2010 = vmul.f32 %v1978, 0.70710677
        %v2011 = vmul.f32 %v1979, 0.70710677
        %v2012 = vmul.f32 %v1980, 0.70710677
        %v2013 = vmul.f32 %v1981, 0.70710677
        %v2014 = vmul.f32 %v1982, 0.70710677
        %v2015 = vmul.f32 %v1983, 0.70710677
        %v2016 = vmul.f32 %v1984, 0.70710677
        %v2017 = vmul.f32 %v1985, 0.70710677
        %v2018 = vmul.f32 %v1986, 0.70710677
        %v2019 = vmul.f32 %v1987, 0.70710677
        %v2020 = vmul.f32 %v1988, 0.70710677
        %v2021 = vmul.f32 %v1989, 0.70710677
        %v2022 = vmul.f32 %v1990, 0.70710677
        %v2023 = vmul.f32 %v1991, 0.70710677
        %v2024 = vmul.f32 %v1992, 0.70710677
        %v2025 = vmul.f32 %v1993, 0.70710677
        %v2026 = vmul.f32 %v1994, 0.70710677
        %v2027 = vmul.f32 %v1995, 0.70710677
        %v2028 = vmul.f32 %v1996, 0.70710677
        %v2029 = vmul.f32 %v1997, 0.70710677
        %v2030 = vmul.f32 %v1998, 0.70710677
        %v2031 = vmul.f32 %v1999, 0.70710677
        %v2032 = vmul.f32 %v2000, 0.70710677
        %v2033 = vmul.f32 %v2001, 0.70710677
        %v2034 = vmul.f32 %v2002, 0.70710677
        %s2035 = scalar_lea.vmem [#allocation7], 128
        %v2036 = vld [vmem:[%s2035] sm:$0xf]
        %v2037 = vld [vmem:[%s2035 + $0x4] sm:$0xf]
        %v2038 = vld [vmem:[%s2035 + $0x8] sm:$0xf]
        %v2039 = vld [vmem:[%s2035 + $0xc] sm:$0xf]
        %v2040 = vld [vmem:[%s2035 + $0x10] sm:$0xf]
        %v2041 = vld [vmem:[%s2035 + $0x14] sm:$0xf]
        %v2042 = vld [vmem:[%s2035 + $0x18] sm:$0xf]
        %v2043 = vld [vmem:[%s2035 + $0x1c] sm:$0xf]
        %v2044 = vld [vmem:[%s2035 + $0x20] sm:$0xf]
        %v2045 = vld [vmem:[%s2035 + $0x24] sm:$0xf]
        %v2046 = vld [vmem:[%s2035 + $0x28] sm:$0xf]
        %v2047 = vld [vmem:[%s2035 + $0x2c] sm:$0xf]
        %v2048 = vld [vmem:[%s2035 + $0x30] sm:$0xf]
        %v2049 = vld [vmem:[%s2035 + $0x34] sm:$0xf]
        %v2050 = vld [vmem:[%s2035 + $0x38] sm:$0xf]
        %v2051 = vld [vmem:[%s2035 + $0x3c] sm:$0xf]
        %s2052 = scalar_lea.vmem [#allocation7], 192
        %v2053 = vld [vmem:[%s2052] sm:$0xf]
        %v2054 = vld [vmem:[%s2052 + $0x4] sm:$0xf]
        %v2055 = vld [vmem:[%s2052 + $0x8] sm:$0xf]
        %v2056 = vld [vmem:[%s2052 + $0xc] sm:$0xf]
        %v2057 = vld [vmem:[%s2052 + $0x10] sm:$0xf]
        %v2058 = vld [vmem:[%s2052 + $0x14] sm:$0xf]
        %v2059 = vld [vmem:[%s2052 + $0x18] sm:$0xf]
        %v2060 = vld [vmem:[%s2052 + $0x1c] sm:$0xf]
        %v2061 = vld [vmem:[%s2052 + $0x20] sm:$0xf]
        %v2062 = vld [vmem:[%s2052 + $0x24] sm:$0xf]
        %v2063 = vld [vmem:[%s2052 + $0x28] sm:$0xf]
        %v2064 = vld [vmem:[%s2052 + $0x2c] sm:$0xf]
        %v2065 = vld [vmem:[%s2052 + $0x30] sm:$0xf]
        %v2066 = vld [vmem:[%s2052 + $0x34] sm:$0xf]
        %v2067 = vld [vmem:[%s2052 + $0x38] sm:$0xf]
        %v2068 = vld [vmem:[%s2052 + $0x3c] sm:$0xf]
        %v2069 = vpack.c.bf16 %v2004, %v2003
        %v2070 = vpack.c.bf16 %v2006, %v2005
        %v2071 = vpack.c.bf16 %v2008, %v2007
        %v2072 = vpack.c.bf16 %v2010, %v2009
        %v2073 = vpack.c.bf16 %v2012, %v2011
        %v2074 = vpack.c.bf16 %v2014, %v2013
        %v2075 = vpack.c.bf16 %v2016, %v2015
        %v2076 = vpack.c.bf16 %v2018, %v2017
        %v2077 = vpack.c.bf16 %v2020, %v2019
        %v2078 = vpack.c.bf16 %v2022, %v2021
        %v2079 = vpack.c.bf16 %v2024, %v2023
        %v2080 = vpack.c.bf16 %v2026, %v2025
        %v2081 = vpack.c.bf16 %v2028, %v2027
        %v2082 = vpack.c.bf16 %v2030, %v2029
        %v2083 = vpack.c.bf16 %v2032, %v2031
        %v2084 = vpack.c.bf16 %v2034, %v2033
        %v2101 = vunpack.c.l.b16 %v2036
        %v2102 = vunpack.c.l.b16 %v2037
        %v2103 = vunpack.c.l.b16 %v2038
        %v2104 = vunpack.c.l.b16 %v2039
        %v2105 = vunpack.c.l.b16 %v2040
        %v2106 = vunpack.c.l.b16 %v2041
        %v2107 = vunpack.c.l.b16 %v2042
        %v2108 = vunpack.c.l.b16 %v2043
        %v2109 = vunpack.c.l.b16 %v2044
        %v2110 = vunpack.c.l.b16 %v2045
        %v2111 = vunpack.c.l.b16 %v2046
        %v2112 = vunpack.c.l.b16 %v2047
        %v2113 = vunpack.c.l.b16 %v2048
        %v2114 = vunpack.c.l.b16 %v2049
        %v2115 = vunpack.c.l.b16 %v2050
        %v2116 = vunpack.c.l.b16 %v2051
        %v2117 = vpack.c.b16 %v2102, %v2101
        %v2118 = vpack.c.b16 %v2104, %v2103
        %v2119 = vpack.c.b16 %v2106, %v2105
        %v2120 = vpack.c.b16 %v2108, %v2107
        %v2121 = vpack.c.b16 %v2110, %v2109
        %v2122 = vpack.c.b16 %v2112, %v2111
        %v2123 = vpack.c.b16 %v2114, %v2113
        %v2124 = vpack.c.b16 %v2116, %v2115
        %2133 = vmatprep.subr.bf16.mxu0 0
        %2134 = vmatpush1.bf16.msra.mxu0 %v2117
        %2135 = vmatprep.subr.bf16.mxu0 0
        %2136 = vmatpush1.bf16.msra.mxu0 %v2118
        %2137 = vmatprep.subr.bf16.mxu0 0
        %2138 = vmatpush1.bf16.msra.mxu0 %v2119
        %2139 = vmatprep.subr.bf16.mxu0 0
        %2140 = vmatpush1.bf16.msra.mxu0 %v2120
        %2141 = vmatprep.subr.bf16.mxu0 0
        %2142 = vmatpush1.bf16.msra.mxu0 %v2121
        %2143 = vmatprep.subr.bf16.mxu0 0
        %2144 = vmatpush1.bf16.msra.mxu0 %v2122
        %2145 = vmatprep.subr.bf16.mxu0 0
        %2146 = vmatpush1.bf16.msra.mxu0 %v2123
        %2147 = vmatprep.subr.bf16.mxu0 0
        %2148 = vmatpush1.bf16.msra.mxu0 %v2124
        %2149 = vmatprep.subr.bf16.mxu0 0
        %2150 = vmatpush1.bf16.msra.mxu0 0
        %2151 = vmatprep.subr.bf16.mxu0 0
        %2152 = vmatpush1.bf16.msra.mxu0 0
        %2153 = vmatprep.subr.bf16.mxu0 0
        %2154 = vmatpush1.bf16.msra.mxu0 0
        %2155 = vmatprep.subr.bf16.mxu0 0
        %2156 = vmatpush1.bf16.msra.mxu0 0
        %2157 = vmatprep.subr.bf16.mxu0 0
        %2158 = vmatpush1.bf16.msra.mxu0 0
        %2159 = vmatprep.subr.bf16.mxu0 0
        %2160 = vmatpush1.bf16.msra.mxu0 0
        %2161 = vmatprep.subr.bf16.mxu0 0
        %2162 = vmatpush1.bf16.msra.mxu0 0
        %2163 = vmatprep.subr.bf16.mxu0 0
        %2164 = vmatpush1.bf16.msra.mxu0 0
        %2165 = vmatprep.mubr.bf16.mxu0 0
        %2166 = vmatmul.mubr.bf16.gmra.mrb[0].mxu0 %v2069
        %v2167 = vpop.f32.mrb[0].mxu0
        %v2168 = vadd.f32 0.0, %v2167
        %v2169 = vpop.f32.mrb[0].mxu0
        %v2170 = vpop.f32.mrb[0].mxu0
        %v2171 = vadd.f32 0.0, %v2170
        %v2172 = vpop.f32.mrb[0].mxu0
        %2173 = vmatprep.mubr.bf16.mxu0 0
        %2174 = vmatmul.mubr.bf16.gmra.mrb[0].mxu0 %v2070
        %v2175 = vpop.f32.mrb[0].mxu0
        %v2176 = vadd.f32 0.0, %v2175
        %v2177 = vpop.f32.mrb[0].mxu0
        %v2178 = vpop.f32.mrb[0].mxu0
        %v2179 = vadd.f32 0.0, %v2178
        %v2180 = vpop.f32.mrb[0].mxu0
        %2181 = vmatprep.mubr.bf16.mxu0 0
        %2182 = vmatmul.mubr.bf16.gmra.mrb[0].mxu0 %v2071
        %v2183 = vpop.f32.mrb[0].mxu0
        %v2184 = vadd.f32 0.0, %v2183
        %v2185 = vpop.f32.mrb[0].mxu0
        %v2186 = vpop.f32.mrb[0].mxu0
        %v2187 = vadd.f32 0.0, %v2186
        %v2188 = vpop.f32.mrb[0].mxu0
        %2189 = vmatprep.mubr.bf16.mxu0 0
        %2190 = vmatmul.mubr.bf16.gmra.mrb[0].mxu0 %v2072
        %v2191 = vpop.f32.mrb[0].mxu0
        %v2192 = vadd.f32 0.0, %v2191
        %v2193 = vpop.f32.mrb[0].mxu0
        %v2194 = vpop.f32.mrb[0].mxu0
        %v2195 = vadd.f32 0.0, %v2194
        %v2196 = vpop.f32.mrb[0].mxu0
        %2197 = vmatprep.mubr.bf16.mxu0 0
        %2198 = vmatmul.mubr.bf16.gmra.mrb[0].mxu0 %v2073
        %v2199 = vpop.f32.mrb[0].mxu0
        %v2200 = vadd.f32 0.0, %v2199
        %v2201 = vpop.f32.mrb[0].mxu0
        %v2202 = vpop.f32.mrb[0].mxu0
        %v2203 = vadd.f32 0.0, %v2202
        %v2204 = vpop.f32.mrb[0].mxu0
        %2205 = vmatprep.mubr.bf16.mxu0 0
        %2206 = vmatmul.mubr.bf16.gmra.mrb[0].mxu0 %v2074
        %v2207 = vpop.f32.mrb[0].mxu0
        %v2208 = vadd.f32 0.0, %v2207
        %v2209 = vpop.f32.mrb[0].mxu0
        %v2210 = vpop.f32.mrb[0].mxu0
        %v2211 = vadd.f32 0.0, %v2210
        %v2212 = vpop.f32.mrb[0].mxu0
        %2213 = vmatprep.mubr.bf16.mxu0 0
        %2214 = vmatmul.mubr.bf16.gmra.mrb[0].mxu0 %v2075
        %v2215 = vpop.f32.mrb[0].mxu0
        %v2216 = vadd.f32 0.0, %v2215
        %v2217 = vpop.f32.mrb[0].mxu0
        %v2218 = vpop.f32.mrb[0].mxu0
        %v2219 = vadd.f32 0.0, %v2218
        %v2220 = vpop.f32.mrb[0].mxu0
        %2221 = vmatprep.mubr.bf16.mxu0 0
        %2222 = vmatmul.mubr.bf16.gmra.mrb[0].mxu0 %v2076
        %v2223 = vpop.f32.mrb[0].mxu0
        %v2224 = vadd.f32 0.0, %v2223
        %v2225 = vpop.f32.mrb[0].mxu0
        %v2226 = vpop.f32.mrb[0].mxu0
        %v2227 = vadd.f32 0.0, %v2226
        %v2228 = vpop.f32.mrb[0].mxu0
        %2229 = vmatprep.mubr.bf16.mxu0 0
        %2230 = vmatmul.mubr.bf16.gmra.mrb[0].mxu0 %v2077
        %v2231 = vpop.f32.mrb[0].mxu0
        %v2232 = vadd.f32 0.0, %v2231
        %v2233 = vpop.f32.mrb[0].mxu0
        %v2234 = vpop.f32.mrb[0].mxu0
        %v2235 = vadd.f32 0.0, %v2234
        %v2236 = vpop.f32.mrb[0].mxu0
        %2237 = vmatprep.mubr.bf16.mxu0 0
        %2238 = vmatmul.mubr.bf16.gmra.mrb[0].mxu0 %v2078
        %v2239 = vpop.f32.mrb[0].mxu0
        %v2240 = vadd.f32 0.0, %v2239
        %v2241 = vpop.f32.mrb[0].mxu0
        %v2242 = vpop.f32.mrb[0].mxu0
        %v2243 = vadd.f32 0.0, %v2242
        %v2244 = vpop.f32.mrb[0].mxu0
        %2245 = vmatprep.mubr.bf16.mxu0 0
        %2246 = vmatmul.mubr.bf16.gmra.mrb[0].mxu0 %v2079
        %v2247 = vpop.f32.mrb[0].mxu0
        %v2248 = vadd.f32 0.0, %v2247
        %v2249 = vpop.f32.mrb[0].mxu0
        %v2250 = vpop.f32.mrb[0].mxu0
        %v2251 = vadd.f32 0.0, %v2250
        %v2252 = vpop.f32.mrb[0].mxu0
        %2253 = vmatprep.mubr.bf16.mxu0 0
        %2254 = vmatmul.mubr.bf16.gmra.mrb[0].mxu0 %v2080
        %v2255 = vpop.f32.mrb[0].mxu0
        %v2256 = vadd.f32 0.0, %v2255
        %v2257 = vpop.f32.mrb[0].mxu0
        %v2258 = vpop.f32.mrb[0].mxu0
        %v2259 = vadd.f32 0.0, %v2258
        %v2260 = vpop.f32.mrb[0].mxu0
        %2261 = vmatprep.mubr.bf16.mxu0 0
        %2262 = vmatmul.mubr.bf16.gmra.mrb[0].mxu0 %v2081
        %v2263 = vpop.f32.mrb[0].mxu0
        %v2264 = vadd.f32 0.0, %v2263
        %v2265 = vpop.f32.mrb[0].mxu0
        %v2266 = vpop.f32.mrb[0].mxu0
        %v2267 = vadd.f32 0.0, %v2266
        %v2268 = vpop.f32.mrb[0].mxu0
        %2269 = vmatprep.mubr.bf16.mxu0 0
        %2270 = vmatmul.mubr.bf16.gmra.mrb[0].mxu0 %v2082
        %v2271 = vpop.f32.mrb[0].mxu0
        %v2272 = vadd.f32 0.0, %v2271
        %v2273 = vpop.f32.mrb[0].mxu0
        %v2274 = vpop.f32.mrb[0].mxu0
        %v2275 = vadd.f32 0.0, %v2274
        %v2276 = vpop.f32.mrb[0].mxu0
        %2277 = vmatprep.mubr.bf16.mxu0 0
        %2278 = vmatmul.mubr.bf16.gmra.mrb[0].mxu0 %v2083
        %v2279 = vpop.f32.mrb[0].mxu0
        %v2280 = vadd.f32 0.0, %v2279
        %v2281 = vpop.f32.mrb[0].mxu0
        %v2282 = vpop.f32.mrb[0].mxu0
        %v2283 = vadd.f32 0.0, %v2282
        %v2284 = vpop.f32.mrb[0].mxu0
        %2285 = vmatprep.mubr.bf16.mxu0 0
        %2286 = vmatmul.mubr.bf16.gmra.mrb[0].mxu0 %v2084
        %v2287 = vpop.f32.mrb[0].mxu0
        %v2288 = vadd.f32 0.0, %v2287
        %v2289 = vpop.f32.mrb[0].mxu0
        %v2290 = vpop.f32.mrb[0].mxu0
        %v2291 = vadd.f32 0.0, %v2290
        %v2292 = vpop.f32.mrb[0].mxu0
        %2293 = vdwg.mxu0
        %v2294 = vmul.f32 %v2168, 0.8333333
        %v2295 = vmul.f32 %v2171, 0.8333333
        %v2296 = vmul.f32 %v2176, 0.8333333
        %v2297 = vmul.f32 %v2179, 0.8333333
        %v2298 = vmul.f32 %v2184, 0.8333333
        %v2299 = vmul.f32 %v2187, 0.8333333
        %v2300 = vmul.f32 %v2192, 0.8333333
        %v2301 = vmul.f32 %v2195, 0.8333333
        %v2302 = vmul.f32 %v2200, 0.8333333
        %v2303 = vmul.f32 %v2203, 0.8333333
        %v2304 = vmul.f32 %v2208, 0.8333333
        %v2305 = vmul.f32 %v2211, 0.8333333
        %v2306 = vmul.f32 %v2216, 0.8333333
        %v2307 = vmul.f32 %v2219, 0.8333333
        %v2308 = vmul.f32 %v2224, 0.8333333
        %v2309 = vmul.f32 %v2227, 0.8333333
        %v2310 = vmul.f32 %v2232, 0.8333333
        %v2311 = vmul.f32 %v2235, 0.8333333
        %v2312 = vmul.f32 %v2240, 0.8333333
        %v2313 = vmul.f32 %v2243, 0.8333333
        %v2314 = vmul.f32 %v2248, 0.8333333
        %v2315 = vmul.f32 %v2251, 0.8333333
        %v2316 = vmul.f32 %v2256, 0.8333333
        %v2317 = vmul.f32 %v2259, 0.8333333
        %v2318 = vmul.f32 %v2264, 0.8333333
        %v2319 = vmul.f32 %v2267, 0.8333333
        %v2320 = vmul.f32 %v2272, 0.8333333
        %v2321 = vmul.f32 %v2275, 0.8333333
        %v2322 = vmul.f32 %v2280, 0.8333333
        %v2323 = vmul.f32 %v2283, 0.8333333
        %v2324 = vmul.f32 %v2288, 0.8333333
        %v2325 = vmul.f32 %v2291, 0.8333333
        %v2326 = vmul.f32 %v2168, 0.5
        %v2327 = vmul.f32 %v2171, 0.5
        %v2328 = vmul.f32 %v2176, 0.5
        %v2329 = vmul.f32 %v2179, 0.5
        %v2330 = vmul.f32 %v2184, 0.5
        %v2331 = vmul.f32 %v2187, 0.5
        %v2332 = vmul.f32 %v2192, 0.5
        %v2333 = vmul.f32 %v2195, 0.5
        %v2334 = vmul.f32 %v2200, 0.5
        %v2335 = vmul.f32 %v2203, 0.5
        %v2336 = vmul.f32 %v2208, 0.5
        %v2337 = vmul.f32 %v2211, 0.5
        %v2338 = vmul.f32 %v2216, 0.5
        %v2339 = vmul.f32 %v2219, 0.5
        %v2340 = vmul.f32 %v2224, 0.5
        %v2341 = vmul.f32 %v2227, 0.5
        %v2342 = vmul.f32 %v2232, 0.5
        %v2343 = vmul.f32 %v2235, 0.5
        %v2344 = vmul.f32 %v2240, 0.5
        %v2345 = vmul.f32 %v2243, 0.5
        %v2346 = vmul.f32 %v2248, 0.5
        %v2347 = vmul.f32 %v2251, 0.5
        %v2348 = vmul.f32 %v2256, 0.5
        %v2349 = vmul.f32 %v2259, 0.5
        %v2350 = vmul.f32 %v2264, 0.5
        %v2351 = vmul.f32 %v2267, 0.5
        %v2352 = vmul.f32 %v2272, 0.5
        %v2353 = vmul.f32 %v2275, 0.5
        %v2354 = vmul.f32 %v2280, 0.5
        %v2355 = vmul.f32 %v2283, 0.5
        %v2356 = vmul.f32 %v2288, 0.5
        %v2357 = vmul.f32 %v2291, 0.5
        %v2358 = vtanh.pop %v2326
        %v2359 = vtanh.pop %v2327
        %v2360 = vtanh.pop %v2328
        %v2361 = vtanh.pop %v2329
        %v2362 = vtanh.pop %v2330
        %v2363 = vtanh.pop %v2331
        %v2364 = vtanh.pop %v2332
        %v2365 = vtanh.pop %v2333
        %v2366 = vtanh.pop %v2334
        %v2367 = vtanh.pop %v2335
        %v2368 = vtanh.pop %v2336
        %v2369 = vtanh.pop %v2337
        %v2370 = vtanh.pop %v2338
        %v2371 = vtanh.pop %v2339
        %v2372 = vtanh.pop %v2340
        %v2373 = vtanh.pop %v2341
        %v2374 = vtanh.pop %v2342
        %v2375 = vtanh.pop %v2343
        %v2376 = vtanh.pop %v2344
        %v2377 = vtanh.pop %v2345
        %v2378 = vtanh.pop %v2346
        %v2379 = vtanh.pop %v2347
        %v2380 = vtanh.pop %v2348
        %v2381 = vtanh.pop %v2349
        %v2382 = vtanh.pop %v2350
        %v2383 = vtanh.pop %v2351
        %v2384 = vtanh.pop %v2352
        %v2385 = vtanh.pop %v2353
        %v2386 = vtanh.pop %v2354
        %v2387 = vtanh.pop %v2355
        %v2388 = vtanh.pop %v2356
        %v2389 = vtanh.pop %v2357
        %v2390 = vadd.f32 %v2358, 1.0
        %v2391 = vadd.f32 %v2359, 1.0
        %v2392 = vadd.f32 %v2360, 1.0
        %v2393 = vadd.f32 %v2361, 1.0
        %v2394 = vadd.f32 %v2362, 1.0
        %v2395 = vadd.f32 %v2363, 1.0
        %v2396 = vadd.f32 %v2364, 1.0
        %v2397 = vadd.f32 %v2365, 1.0
        %v2398 = vadd.f32 %v2366, 1.0
        %v2399 = vadd.f32 %v2367, 1.0
        %v2400 = vadd.f32 %v2368, 1.0
        %v2401 = vadd.f32 %v2369, 1.0
        %v2402 = vadd.f32 %v2370, 1.0
        %v2403 = vadd.f32 %v2371, 1.0
        %v2404 = vadd.f32 %v2372, 1.0
        %v2405 = vadd.f32 %v2373, 1.0
        %v2406 = vadd.f32 %v2374, 1.0
        %v2407 = vadd.f32 %v2375, 1.0
        %v2408 = vadd.f32 %v2376, 1.0
        %v2409 = vadd.f32 %v2377, 1.0
        %v2410 = vadd.f32 %v2378, 1.0
        %v2411 = vadd.f32 %v2379, 1.0
        %v2412 = vadd.f32 %v2380, 1.0
        %v2413 = vadd.f32 %v2381, 1.0
        %v2414 = vadd.f32 %v2382, 1.0
        %v2415 = vadd.f32 %v2383, 1.0
        %v2416 = vadd.f32 %v2384, 1.0
        %v2417 = vadd.f32 %v2385, 1.0
        %v2418 = vadd.f32 %v2386, 1.0
        %v2419 = vadd.f32 %v2387, 1.0
        %v2420 = vadd.f32 %v2388, 1.0
        %v2421 = vadd.f32 %v2389, 1.0
        %v2422 = vmul.f32 %v2294, %v2390
        %v2423 = vmul.f32 %v2295, %v2391
        %v2424 = vmul.f32 %v2296, %v2392
        %v2425 = vmul.f32 %v2297, %v2393
        %v2426 = vmul.f32 %v2298, %v2394
        %v2427 = vmul.f32 %v2299, %v2395
        %v2428 = vmul.f32 %v2300, %v2396
        %v2429 = vmul.f32 %v2301, %v2397
        %v2430 = vmul.f32 %v2302, %v2398
        %v2431 = vmul.f32 %v2303, %v2399
        %v2432 = vmul.f32 %v2304, %v2400
        %v2433 = vmul.f32 %v2305, %v2401
        %v2434 = vmul.f32 %v2306, %v2402
        %v2435 = vmul.f32 %v2307, %v2403
        %v2436 = vmul.f32 %v2308, %v2404
        %v2437 = vmul.f32 %v2309, %v2405
        %v2438 = vmul.f32 %v2310, %v2406
        %v2439 = vmul.f32 %v2311, %v2407
        %v2440 = vmul.f32 %v2312, %v2408
        %v2441 = vmul.f32 %v2313, %v2409
        %v2442 = vmul.f32 %v2314, %v2410
        %v2443 = vmul.f32 %v2315, %v2411
        %v2444 = vmul.f32 %v2316, %v2412
        %v2445 = vmul.f32 %v2317, %v2413
        %v2446 = vmul.f32 %v2318, %v2414
        %v2447 = vmul.f32 %v2319, %v2415
        %v2448 = vmul.f32 %v2320, %v2416
        %v2449 = vmul.f32 %v2321, %v2417
        %v2450 = vmul.f32 %v2322, %v2418
        %v2451 = vmul.f32 %v2323, %v2419
        %v2452 = vmul.f32 %v2324, %v2420
        %v2453 = vmul.f32 %v2325, %v2421
        %v2454 = vpack.c.bf16 %v2423, %v2422
        %v2455 = vpack.c.bf16 %v2425, %v2424
        %v2456 = vpack.c.bf16 %v2427, %v2426
        %v2457 = vpack.c.bf16 %v2429, %v2428
        %v2458 = vpack.c.bf16 %v2431, %v2430
        %v2459 = vpack.c.bf16 %v2433, %v2432
        %v2460 = vpack.c.bf16 %v2435, %v2434
        %v2461 = vpack.c.bf16 %v2437, %v2436
        %v2462 = vpack.c.bf16 %v2439, %v2438
        %v2463 = vpack.c.bf16 %v2441, %v2440
        %v2464 = vpack.c.bf16 %v2443, %v2442
        %v2465 = vpack.c.bf16 %v2445, %v2444
        %v2466 = vpack.c.bf16 %v2447, %v2446
        %v2467 = vpack.c.bf16 %v2449, %v2448
        %v2468 = vpack.c.bf16 %v2451, %v2450
        %v2469 = vpack.c.bf16 %v2453, %v2452
        %v2486 = vunpack.c.l.b16 %v2053
        %v2487 = vunpack.c.l.b16 %v2054
        %v2488 = vunpack.c.l.b16 %v2055
        %v2489 = vunpack.c.l.b16 %v2056
        %v2490 = vunpack.c.l.b16 %v2057
        %v2491 = vunpack.c.l.b16 %v2058
        %v2492 = vunpack.c.l.b16 %v2059
        %v2493 = vunpack.c.l.b16 %v2060
        %v2494 = vunpack.c.l.b16 %v2061
        %v2495 = vunpack.c.l.b16 %v2062
        %v2496 = vunpack.c.l.b16 %v2063
        %v2497 = vunpack.c.l.b16 %v2064
        %v2498 = vunpack.c.l.b16 %v2065
        %v2499 = vunpack.c.l.b16 %v2066
        %v2500 = vunpack.c.l.b16 %v2067
        %v2501 = vunpack.c.l.b16 %v2068
        %v2502 = vpack.c.b16 %v2487, %v2486
        %v2503 = vpack.c.b16 %v2489, %v2488
        %v2504 = vpack.c.b16 %v2491, %v2490
        %v2505 = vpack.c.b16 %v2493, %v2492
        %v2506 = vpack.c.b16 %v2495, %v2494
        %v2507 = vpack.c.b16 %v2497, %v2496
        %v2508 = vpack.c.b16 %v2499, %v2498
        %v2509 = vpack.c.b16 %v2501, %v2500
        %2518 = vmatprep.subr.bf16.mxu0 0
        %2519 = vmatpush1.bf16.msra.mxu0 %v2502
        %2520 = vmatprep.subr.bf16.mxu0 0
        %2521 = vmatpush1.bf16.msra.mxu0 %v2503
        %2522 = vmatprep.subr.bf16.mxu0 0
        %2523 = vmatpush1.bf16.msra.mxu0 %v2504
        %2524 = vmatprep.subr.bf16.mxu0 0
        %2525 = vmatpush1.bf16.msra.mxu0 %v2505
        %2526 = vmatprep.subr.bf16.mxu0 0
        %2527 = vmatpush1.bf16.msra.mxu0 %v2506
        %2528 = vmatprep.subr.bf16.mxu0 0
        %2529 = vmatpush1.bf16.msra.mxu0 %v2507
        %2530 = vmatprep.subr.bf16.mxu0 0
        %2531 = vmatpush1.bf16.msra.mxu0 %v2508
        %2532 = vmatprep.subr.bf16.mxu0 0
        %2533 = vmatpush1.bf16.msra.mxu0 %v2509
        %2534 = vmatprep.subr.bf16.mxu0 0
        %2535 = vmatpush1.bf16.msra.mxu0 0
        %2536 = vmatprep.subr.bf16.mxu0 0
        %2537 = vmatpush1.bf16.msra.mxu0 0
        %2538 = vmatprep.subr.bf16.mxu0 0
        %2539 = vmatpush1.bf16.msra.mxu0 0
        %2540 = vmatprep.subr.bf16.mxu0 0
        %2541 = vmatpush1.bf16.msra.mxu0 0
        %2542 = vmatprep.subr.bf16.mxu0 0
        %2543 = vmatpush1.bf16.msra.mxu0 0
        %2544 = vmatprep.subr.bf16.mxu0 0
        %2545 = vmatpush1.bf16.msra.mxu0 0
        %2546 = vmatprep.subr.bf16.mxu0 0
        %2547 = vmatpush1.bf16.msra.mxu0 0
        %2548 = vmatprep.subr.bf16.mxu0 0
        %2549 = vmatpush1.bf16.msra.mxu0 0
        %2550 = vmatprep.mubr.bf16.mxu0 0
        %2551 = vmatmul.mubr.bf16.gmra.mrb[0].mxu0 %v2454
        %v2552 = vpop.f32.mrb[0].mxu0
        %v2553 = vadd.f32 0.0, %v2552
        %v2554 = vpop.f32.mrb[0].mxu0
        %v2555 = vpop.f32.mrb[0].mxu0
        %v2556 = vadd.f32 0.0, %v2555
        %v2557 = vpop.f32.mrb[0].mxu0
        %2558 = vmatprep.mubr.bf16.mxu0 0
        %2559 = vmatmul.mubr.bf16.gmra.mrb[0].mxu0 %v2455
        %v2560 = vpop.f32.mrb[0].mxu0
        %v2561 = vadd.f32 0.0, %v2560
        %v2562 = vpop.f32.mrb[0].mxu0
        %v2563 = vpop.f32.mrb[0].mxu0
        %v2564 = vadd.f32 0.0, %v2563
        %v2565 = vpop.f32.mrb[0].mxu0
        %2566 = vmatprep.mubr.bf16.mxu0 0
        %2567 = vmatmul.mubr.bf16.gmra.mrb[0].mxu0 %v2456
        %v2568 = vpop.f32.mrb[0].mxu0
        %v2569 = vadd.f32 0.0, %v2568
        %v2570 = vpop.f32.mrb[0].mxu0
        %v2571 = vpop.f32.mrb[0].mxu0
        %v2572 = vadd.f32 0.0, %v2571
        %v2573 = vpop.f32.mrb[0].mxu0
        %2574 = vmatprep.mubr.bf16.mxu0 0
        %2575 = vmatmul.mubr.bf16.gmra.mrb[0].mxu0 %v2457
        %v2576 = vpop.f32.mrb[0].mxu0
        %v2577 = vadd.f32 0.0, %v2576
        %v2578 = vpop.f32.mrb[0].mxu0
        %v2579 = vpop.f32.mrb[0].mxu0
        %v2580 = vadd.f32 0.0, %v2579
        %v2581 = vpop.f32.mrb[0].mxu0
        %2582 = vmatprep.mubr.bf16.mxu0 0
        %2583 = vmatmul.mubr.bf16.gmra.mrb[0].mxu0 %v2458
        %v2584 = vpop.f32.mrb[0].mxu0
        %v2585 = vadd.f32 0.0, %v2584
        %v2586 = vpop.f32.mrb[0].mxu0
        %v2587 = vpop.f32.mrb[0].mxu0
        %v2588 = vadd.f32 0.0, %v2587
        %v2589 = vpop.f32.mrb[0].mxu0
        %2590 = vmatprep.mubr.bf16.mxu0 0
        %2591 = vmatmul.mubr.bf16.gmra.mrb[0].mxu0 %v2459
        %v2592 = vpop.f32.mrb[0].mxu0
        %v2593 = vadd.f32 0.0, %v2592
        %v2594 = vpop.f32.mrb[0].mxu0
        %v2595 = vpop.f32.mrb[0].mxu0
        %v2596 = vadd.f32 0.0, %v2595
        %v2597 = vpop.f32.mrb[0].mxu0
        %2598 = vmatprep.mubr.bf16.mxu0 0
        %2599 = vmatmul.mubr.bf16.gmra.mrb[0].mxu0 %v2460
        %v2600 = vpop.f32.mrb[0].mxu0
        %v2601 = vadd.f32 0.0, %v2600
        %v2602 = vpop.f32.mrb[0].mxu0
        %v2603 = vpop.f32.mrb[0].mxu0
        %v2604 = vadd.f32 0.0, %v2603
        %v2605 = vpop.f32.mrb[0].mxu0
        %2606 = vmatprep.mubr.bf16.mxu0 0
        %2607 = vmatmul.mubr.bf16.gmra.mrb[0].mxu0 %v2461
        %v2608 = vpop.f32.mrb[0].mxu0
        %v2609 = vadd.f32 0.0, %v2608
        %v2610 = vpop.f32.mrb[0].mxu0
        %v2611 = vpop.f32.mrb[0].mxu0
        %v2612 = vadd.f32 0.0, %v2611
        %v2613 = vpop.f32.mrb[0].mxu0
        %2614 = vmatprep.mubr.bf16.mxu0 0
        %2615 = vmatmul.mubr.bf16.gmra.mrb[0].mxu0 %v2462
        %v2616 = vpop.f32.mrb[0].mxu0
        %v2617 = vadd.f32 0.0, %v2616
        %v2618 = vpop.f32.mrb[0].mxu0
        %v2619 = vpop.f32.mrb[0].mxu0
        %v2620 = vadd.f32 0.0, %v2619
        %v2621 = vpop.f32.mrb[0].mxu0
        %2622 = vmatprep.mubr.bf16.mxu0 0
        %2623 = vmatmul.mubr.bf16.gmra.mrb[0].mxu0 %v2463
        %v2624 = vpop.f32.mrb[0].mxu0
        %v2625 = vadd.f32 0.0, %v2624
        %v2626 = vpop.f32.mrb[0].mxu0
        %v2627 = vpop.f32.mrb[0].mxu0
        %v2628 = vadd.f32 0.0, %v2627
        %v2629 = vpop.f32.mrb[0].mxu0
        %2630 = vmatprep.mubr.bf16.mxu0 0
        %2631 = vmatmul.mubr.bf16.gmra.mrb[0].mxu0 %v2464
        %v2632 = vpop.f32.mrb[0].mxu0
        %v2633 = vadd.f32 0.0, %v2632
        %v2634 = vpop.f32.mrb[0].mxu0
        %v2635 = vpop.f32.mrb[0].mxu0
        %v2636 = vadd.f32 0.0, %v2635
        %v2637 = vpop.f32.mrb[0].mxu0
        %2638 = vmatprep.mubr.bf16.mxu0 0
        %2639 = vmatmul.mubr.bf16.gmra.mrb[0].mxu0 %v2465
        %v2640 = vpop.f32.mrb[0].mxu0
        %v2641 = vadd.f32 0.0, %v2640
        %v2642 = vpop.f32.mrb[0].mxu0
        %v2643 = vpop.f32.mrb[0].mxu0
        %v2644 = vadd.f32 0.0, %v2643
        %v2645 = vpop.f32.mrb[0].mxu0
        %2646 = vmatprep.mubr.bf16.mxu0 0
        %2647 = vmatmul.mubr.bf16.gmra.mrb[0].mxu0 %v2466
        %v2648 = vpop.f32.mrb[0].mxu0
        %v2649 = vadd.f32 0.0, %v2648
        %v2650 = vpop.f32.mrb[0].mxu0
        %v2651 = vpop.f32.mrb[0].mxu0
        %v2652 = vadd.f32 0.0, %v2651
        %v2653 = vpop.f32.mrb[0].mxu0
        %2654 = vmatprep.mubr.bf16.mxu0 0
        %2655 = vmatmul.mubr.bf16.gmra.mrb[0].mxu0 %v2467
        %v2656 = vpop.f32.mrb[0].mxu0
        %v2657 = vadd.f32 0.0, %v2656
        %v2658 = vpop.f32.mrb[0].mxu0
        %v2659 = vpop.f32.mrb[0].mxu0
        %v2660 = vadd.f32 0.0, %v2659
        %v2661 = vpop.f32.mrb[0].mxu0
        %2662 = vmatprep.mubr.bf16.mxu0 0
        %2663 = vmatmul.mubr.bf16.gmra.mrb[0].mxu0 %v2468
        %v2664 = vpop.f32.mrb[0].mxu0
        %v2665 = vadd.f32 0.0, %v2664
        %v2666 = vpop.f32.mrb[0].mxu0
        %v2667 = vpop.f32.mrb[0].mxu0
        %v2668 = vadd.f32 0.0, %v2667
        %v2669 = vpop.f32.mrb[0].mxu0
        %2670 = vmatprep.mubr.bf16.mxu0 0
        %2671 = vmatmul.mubr.bf16.gmra.mrb[0].mxu0 %v2469
        %v2672 = vpop.f32.mrb[0].mxu0
        %v2673 = vadd.f32 0.0, %v2672
        %v2674 = vpop.f32.mrb[0].mxu0
        %v2675 = vpop.f32.mrb[0].mxu0
        %v2676 = vadd.f32 0.0, %v2675
        %v2677 = vpop.f32.mrb[0].mxu0
        %2678 = vdwg.mxu0
        %v2679 = vmul.f32 %v2553, 0.8333333
        %v2680 = vmul.f32 %v2556, 0.8333333
        %v2681 = vmul.f32 %v2561, 0.8333333
        %v2682 = vmul.f32 %v2564, 0.8333333
        %v2683 = vmul.f32 %v2569, 0.8333333
        %v2684 = vmul.f32 %v2572, 0.8333333
        %v2685 = vmul.f32 %v2577, 0.8333333
        %v2686 = vmul.f32 %v2580, 0.8333333
        %v2687 = vmul.f32 %v2585, 0.8333333
        %v2688 = vmul.f32 %v2588, 0.8333333
        %v2689 = vmul.f32 %v2593, 0.8333333
        %v2690 = vmul.f32 %v2596, 0.8333333
        %v2691 = vmul.f32 %v2601, 0.8333333
        %v2692 = vmul.f32 %v2604, 0.8333333
        %v2693 = vmul.f32 %v2609, 0.8333333
        %v2694 = vmul.f32 %v2612, 0.8333333
        %v2695 = vmul.f32 %v2617, 0.8333333
        %v2696 = vmul.f32 %v2620, 0.8333333
        %v2697 = vmul.f32 %v2625, 0.8333333
        %v2698 = vmul.f32 %v2628, 0.8333333
        %v2699 = vmul.f32 %v2633, 0.8333333
        %v2700 = vmul.f32 %v2636, 0.8333333
        %v2701 = vmul.f32 %v2641, 0.8333333
        %v2702 = vmul.f32 %v2644, 0.8333333
        %v2703 = vmul.f32 %v2649, 0.8333333
        %v2704 = vmul.f32 %v2652, 0.8333333
        %v2705 = vmul.f32 %v2657, 0.8333333
        %v2706 = vmul.f32 %v2660, 0.8333333
        %v2707 = vmul.f32 %v2665, 0.8333333
        %v2708 = vmul.f32 %v2668, 0.8333333
        %v2709 = vmul.f32 %v2673, 0.8333333
        %v2710 = vmul.f32 %v2676, 0.8333333
        %v2711 = vmul.f32 %v2553, 0.5
        %v2712 = vmul.f32 %v2556, 0.5
        %v2713 = vmul.f32 %v2561, 0.5
        %v2714 = vmul.f32 %v2564, 0.5
        %v2715 = vmul.f32 %v2569, 0.5
        %v2716 = vmul.f32 %v2572, 0.5
        %v2717 = vmul.f32 %v2577, 0.5
        %v2718 = vmul.f32 %v2580, 0.5
        %v2719 = vmul.f32 %v2585, 0.5
        %v2720 = vmul.f32 %v2588, 0.5
        %v2721 = vmul.f32 %v2593, 0.5
        %v2722 = vmul.f32 %v2596, 0.5
        %v2723 = vmul.f32 %v2601, 0.5
        %v2724 = vmul.f32 %v2604, 0.5
        %v2725 = vmul.f32 %v2609, 0.5
        %v2726 = vmul.f32 %v2612, 0.5
        %v2727 = vmul.f32 %v2617, 0.5
        %v2728 = vmul.f32 %v2620, 0.5
        %v2729 = vmul.f32 %v2625, 0.5
        %v2730 = vmul.f32 %v2628, 0.5
        %v2731 = vmul.f32 %v2633, 0.5
        %v2732 = vmul.f32 %v2636, 0.5
        %v2733 = vmul.f32 %v2641, 0.5
        %v2734 = vmul.f32 %v2644, 0.5
        %v2735 = vmul.f32 %v2649, 0.5
        %v2736 = vmul.f32 %v2652, 0.5
        %v2737 = vmul.f32 %v2657, 0.5
        %v2738 = vmul.f32 %v2660, 0.5
        %v2739 = vmul.f32 %v2665, 0.5
        %v2740 = vmul.f32 %v2668, 0.5
        %v2741 = vmul.f32 %v2673, 0.5
        %v2742 = vmul.f32 %v2676, 0.5
        %v2743 = vtanh.pop %v2711
        %v2744 = vtanh.pop %v2712
        %v2745 = vtanh.pop %v2713
        %v2746 = vtanh.pop %v2714
        %v2747 = vtanh.pop %v2715
        %v2748 = vtanh.pop %v2716
        %v2749 = vtanh.pop %v2717
        %v2750 = vtanh.pop %v2718
        %v2751 = vtanh.pop %v2719
        %v2752 = vtanh.pop %v2720
        %v2753 = vtanh.pop %v2721
        %v2754 = vtanh.pop %v2722
        %v2755 = vtanh.pop %v2723
        %v2756 = vtanh.pop %v2724
        %v2757 = vtanh.pop %v2725
        %v2758 = vtanh.pop %v2726
        %v2759 = vtanh.pop %v2727
        %v2760 = vtanh.pop %v2728
        %v2761 = vtanh.pop %v2729
        %v2762 = vtanh.pop %v2730
        %v2763 = vtanh.pop %v2731
        %v2764 = vtanh.pop %v2732
        %v2765 = vtanh.pop %v2733
        %v2766 = vtanh.pop %v2734
        %v2767 = vtanh.pop %v2735
        %v2768 = vtanh.pop %v2736
        %v2769 = vtanh.pop %v2737
        %v2770 = vtanh.pop %v2738
        %v2771 = vtanh.pop %v2739
        %v2772 = vtanh.pop %v2740
        %v2773 = vtanh.pop %v2741
        %v2774 = vtanh.pop %v2742
        %v2775 = vadd.f32 %v2743, 1.0
        %v2776 = vadd.f32 %v2744, 1.0
        %v2777 = vadd.f32 %v2745, 1.0
        %v2778 = vadd.f32 %v2746, 1.0
        %v2779 = vadd.f32 %v2747, 1.0
        %v2780 = vadd.f32 %v2748, 1.0
        %v2781 = vadd.f32 %v2749, 1.0
        %v2782 = vadd.f32 %v2750, 1.0
        %v2783 = vadd.f32 %v2751, 1.0
        %v2784 = vadd.f32 %v2752, 1.0
        %v2785 = vadd.f32 %v2753, 1.0
        %v2786 = vadd.f32 %v2754, 1.0
        %v2787 = vadd.f32 %v2755, 1.0
        %v2788 = vadd.f32 %v2756, 1.0
        %v2789 = vadd.f32 %v2757, 1.0
        %v2790 = vadd.f32 %v2758, 1.0
        %v2791 = vadd.f32 %v2759, 1.0
        %v2792 = vadd.f32 %v2760, 1.0
        %v2793 = vadd.f32 %v2761, 1.0
        %v2794 = vadd.f32 %v2762, 1.0
        %v2795 = vadd.f32 %v2763, 1.0
        %v2796 = vadd.f32 %v2764, 1.0
        %v2797 = vadd.f32 %v2765, 1.0
        %v2798 = vadd.f32 %v2766, 1.0
        %v2799 = vadd.f32 %v2767, 1.0
        %v2800 = vadd.f32 %v2768, 1.0
        %v2801 = vadd.f32 %v2769, 1.0
        %v2802 = vadd.f32 %v2770, 1.0
        %v2803 = vadd.f32 %v2771, 1.0
        %v2804 = vadd.f32 %v2772, 1.0
        %v2805 = vadd.f32 %v2773, 1.0
        %v2806 = vadd.f32 %v2774, 1.0
        %v2807 = vmul.f32 %v2679, %v2775
        %v2808 = vmul.f32 %v2680, %v2776
        %v2809 = vmul.f32 %v2681, %v2777
        %v2810 = vmul.f32 %v2682, %v2778
        %v2811 = vmul.f32 %v2683, %v2779
        %v2812 = vmul.f32 %v2684, %v2780
        %v2813 = vmul.f32 %v2685, %v2781
        %v2814 = vmul.f32 %v2686, %v2782
        %v2815 = vmul.f32 %v2687, %v2783
        %v2816 = vmul.f32 %v2688, %v2784
        %v2817 = vmul.f32 %v2689, %v2785
        %v2818 = vmul.f32 %v2690, %v2786
        %v2819 = vmul.f32 %v2691, %v2787
        %v2820 = vmul.f32 %v2692, %v2788
        %v2821 = vmul.f32 %v2693, %v2789
        %v2822 = vmul.f32 %v2694, %v2790
        %v2823 = vmul.f32 %v2695, %v2791
        %v2824 = vmul.f32 %v2696, %v2792
        %v2825 = vmul.f32 %v2697, %v2793
        %v2826 = vmul.f32 %v2698, %v2794
        %v2827 = vmul.f32 %v2699, %v2795
        %v2828 = vmul.f32 %v2700, %v2796
        %v2829 = vmul.f32 %v2701, %v2797
        %v2830 = vmul.f32 %v2702, %v2798
        %v2831 = vmul.f32 %v2703, %v2799
        %v2832 = vmul.f32 %v2704, %v2800
        %v2833 = vmul.f32 %v2705, %v2801
        %v2834 = vmul.f32 %v2706, %v2802
        %v2835 = vmul.f32 %v2707, %v2803
        %v2836 = vmul.f32 %v2708, %v2804
        %v2837 = vmul.f32 %v2709, %v2805
        %v2838 = vmul.f32 %v2710, %v2806
        %v2839 = vadd.f32 %v2003, %v2807
        %v2840 = vadd.f32 %v2004, %v2808
        %v2841 = vadd.f32 %v2005, %v2809
        %v2842 = vadd.f32 %v2006, %v2810
        %v2843 = vadd.f32 %v2007, %v2811
        %v2844 = vadd.f32 %v2008, %v2812
        %v2845 = vadd.f32 %v2009, %v2813
        %v2846 = vadd.f32 %v2010, %v2814
        %v2847 = vadd.f32 %v2011, %v2815
        %v2848 = vadd.f32 %v2012, %v2816
        %v2849 = vadd.f32 %v2013, %v2817
        %v2850 = vadd.f32 %v2014, %v2818
        %v2851 = vadd.f32 %v2015, %v2819
        %v2852 = vadd.f32 %v2016, %v2820
        %v2853 = vadd.f32 %v2017, %v2821
        %v2854 = vadd.f32 %v2018, %v2822
        %v2855 = vadd.f32 %v2019, %v2823
        %v2856 = vadd.f32 %v2020, %v2824
        %v2857 = vadd.f32 %v2021, %v2825
        %v2858 = vadd.f32 %v2022, %v2826
        %v2859 = vadd.f32 %v2023, %v2827
        %v2860 = vadd.f32 %v2024, %v2828
        %v2861 = vadd.f32 %v2025, %v2829
        %v2862 = vadd.f32 %v2026, %v2830
        %v2863 = vadd.f32 %v2027, %v2831
        %v2864 = vadd.f32 %v2028, %v2832
        %v2865 = vadd.f32 %v2029, %v2833
        %v2866 = vadd.f32 %v2030, %v2834
        %v2867 = vadd.f32 %v2031, %v2835
        %v2868 = vadd.f32 %v2032, %v2836
        %v2869 = vadd.f32 %v2033, %v2837
        %v2870 = vadd.f32 %v2034, %v2838
        %v2871 = vmul.f32 %v2839, 0.70710677
        %v2872 = vmul.f32 %v2840, 0.70710677
        %v2873 = vmul.f32 %v2841, 0.70710677
        %v2874 = vmul.f32 %v2842, 0.70710677
        %v2875 = vmul.f32 %v2843, 0.70710677
        %v2876 = vmul.f32 %v2844, 0.70710677
        %v2877 = vmul.f32 %v2845, 0.70710677
        %v2878 = vmul.f32 %v2846, 0.70710677
        %v2879 = vmul.f32 %v2847, 0.70710677
        %v2880 = vmul.f32 %v2848, 0.70710677
        %v2881 = vmul.f32 %v2849, 0.70710677
        %v2882 = vmul.f32 %v2850, 0.70710677
        %v2883 = vmul.f32 %v2851, 0.70710677
        %v2884 = vmul.f32 %v2852, 0.70710677
        %v2885 = vmul.f32 %v2853, 0.70710677
        %v2886 = vmul.f32 %v2854, 0.70710677
        %v2887 = vmul.f32 %v2855, 0.70710677
        %v2888 = vmul.f32 %v2856, 0.70710677
        %v2889 = vmul.f32 %v2857, 0.70710677
        %v2890 = vmul.f32 %v2858, 0.70710677
        %v2891 = vmul.f32 %v2859, 0.70710677
        %v2892 = vmul.f32 %v2860, 0.70710677
        %v2893 = vmul.f32 %v2861, 0.70710677
        %v2894 = vmul.f32 %v2862, 0.70710677
        %v2895 = vmul.f32 %v2863, 0.70710677
        %v2896 = vmul.f32 %v2864, 0.70710677
        %v2897 = vmul.f32 %v2865, 0.70710677
        %v2898 = vmul.f32 %v2866, 0.70710677
        %v2899 = vmul.f32 %v2867, 0.70710677
        %v2900 = vmul.f32 %v2868, 0.70710677
        %v2901 = vmul.f32 %v2869, 0.70710677
        %v2902 = vmul.f32 %v2870, 0.70710677
        %2903 = vst [vmem:[%s225] sm:$0xff] %v2871
        %2904 = vst [vmem:[%s225 + $0x8] sm:$0xff] %v2872
        %2905 = vst [vmem:[%s225 + $0x10] sm:$0xff] %v2873
        %2906 = vst [vmem:[%s225 + $0x18] sm:$0xff] %v2874
        %2907 = vst [vmem:[%s225 + $0x20] sm:$0xff] %v2875
        %2908 = vst [vmem:[%s225 + $0x28] sm:$0xff] %v2876
        %2909 = vst [vmem:[%s225 + $0x30] sm:$0xff] %v2877
        %2910 = vst [vmem:[%s225 + $0x38] sm:$0xff] %v2878
        %2911 = vst [vmem:[%s225 + $0x40] sm:$0xff] %v2879
        %2912 = vst [vmem:[%s225 + $0x48] sm:$0xff] %v2880
        %2913 = vst [vmem:[%s225 + $0x50] sm:$0xff] %v2881
        %2914 = vst [vmem:[%s225 + $0x58] sm:$0xff] %v2882
        %2915 = vst [vmem:[%s225 + $0x60] sm:$0xff] %v2883
        %2916 = vst [vmem:[%s225 + $0x68] sm:$0xff] %v2884
        %2917 = vst [vmem:[%s225 + $0x70] sm:$0xff] %v2885
        %2918 = vst [vmem:[%s225 + $0x78] sm:$0xff] %v2886
        %2919 = vst [vmem:[%s225 + $0x80] sm:$0xff] %v2887
        %2920 = vst [vmem:[%s225 + $0x88] sm:$0xff] %v2888
        %2921 = vst [vmem:[%s225 + $0x90] sm:$0xff] %v2889
        %2922 = vst [vmem:[%s225 + $0x98] sm:$0xff] %v2890
        %2923 = vst [vmem:[%s225 + $0xa0] sm:$0xff] %v2891
        %2924 = vst [vmem:[%s225 + $0xa8] sm:$0xff] %v2892
        %2925 = vst [vmem:[%s225 + $0xb0] sm:$0xff] %v2893
        %2926 = vst [vmem:[%s225 + $0xb8] sm:$0xff] %v2894
        %2927 = vst [vmem:[%s225 + $0xc0] sm:$0xff] %v2895
        %2928 = vst [vmem:[%s225 + $0xc8] sm:$0xff] %v2896
        %2929 = vst [vmem:[%s225 + $0xd0] sm:$0xff] %v2897
        %2930 = vst [vmem:[%s225 + $0xd8] sm:$0xff] %v2898
        %2931 = vst [vmem:[%s225 + $0xe0] sm:$0xff] %v2899
        %2932 = vst [vmem:[%s225 + $0xe8] sm:$0xff] %v2900
        %2933 = vst [vmem:[%s225 + $0xf0] sm:$0xff] %v2901
        %2934 = vst [vmem:[%s225 + $0xf8] sm:$0xff] %v2902
        %s2935 = sand.u32 %s97, 1
        %s2936 = scalar_lea.sflag [#allocation4], %s2935
        %s2937 = sand.u32 %s97, 1
        %s2938 = smul.addr %s2937, 256
        %s2939 = scalar_lea.vmem [#allocation8], %s2938
        // Predicated region
        $region45: #{tpu_custom_call.1} parent=31 // pred_check
          %p2940 = pneg %p107
        $region46: #{tpu_custom_call.1} parent=31 // pred_check_branch
          %2942 = sbr.rel (%p2940) target = $region48
        $region47: #{tpu_custom_call.1} parent=31 // pred_region
          %s2943 = smul.u32 32, %s21
          %s2944 = ssub.s32 38, %s2943
          %p2945 = scmp.lt.s32.totalorder %s2944, 32
          %s2946 = scalar_select %p2945, %s2944, 32
          %s2947 = smul.u32 128, %s2946
          %s2949 = ssub.s32 4096, %s2947
          %2950 = vsyncadd %s2936, %s2949
          %p2951 = scmp.ne.s32.totalorder 0, %s2947
          %s2952 = smul.addr %s2943, 128
          %s2953 = scalar_lea.hbm %s3, %s2952
          %s2954 = smul.u32 8, %s2946
          %s2955 = sshll.u32 %s2939, 4
          %s2956 = int_to_ptr.vmem [resolvable:$true] %s2955
          %s2957 = sshll.u32 %s2954, 4
          %2961 = dma.vmem_to_hbm [thread:$0]  (%p2951), %s2956, %s2957, %s2953, %s2936, 128, 128, 8
        $region48: #{tpu_custom_call.1} parent=31 // pred_fallthru
          _
      $region32: #{tpu_custom_call.1} parent=5 // pred_fallthru
        _
      %p2962 = scmp.le.s32.totalorder 2, %s16
      // Predicated region
      $region49: #{tpu_custom_call.1} parent=5 // pred_check
        %p2963 = pneg %p2962
      $region50: #{tpu_custom_call.1} parent=5 // pred_check_branch
        %2965 = sbr.rel (%p2963) target = $region52
      $region51: #{tpu_custom_call.1} parent=5 // pred_region
        %s2966 = ssub.s32 %s16, 2
        // Predicated region
        $region53: #{tpu_custom_call.1} parent=51 // pred_check
          %p2967 = pneg %p113
        $region54: #{tpu_custom_call.1} parent=51 // pred_check_branch
          %2969 = sbr.rel (%p2967) target = $region56
        $region55: #{tpu_custom_call.1} parent=51 // pred_region
          %s2970 = sand.u32 %s98, 1
          %s2971 = scalar_lea.sflag [#allocation4], %s2970
          %s2972 = sand.u32 %s98, 1
          %s2973 = smul.addr %s2972, 256
          %s2974 = scalar_lea.vmem [#allocation8], %s2973
          %2975 = dma.done %s2971, 4096
        $region56: #{tpu_custom_call.1} parent=51 // pred_fallthru
          _
      $region52: #{tpu_custom_call.1} parent=5 // pred_fallthru
        _
    $region6: #{tpu_custom_call.1} parent=1 // loop_footer
      %s20 = sadd.s32 1, %s16
    $region7: #{tpu_custom_call.1} parent=1 // loop_footer_branch
      %15 = sbr.rel target = $region3
    $region8: #{tpu_custom_call.1} parent=1 // loop_exit
      _
    %2976 = vsyncpa [#allocation3], 1
    %s2977 = scalar_lea.sflag [#allocation3], 1
    %2978 = vsyncpa %s2977, 1
    %2979 = vsyncpa [#allocation6], 1
    %2980 = vsyncpa [#allocation4], 1
    %s2981 = scalar_lea.sflag [#allocation4], 1
    %2982 = vsyncpa %s2981, 1

</llo_original>
